<compile_context>
chip_gen: v6e
topology: v6e:2x2x1
jax: 0.10.0
libtpu: 0.0.40
codegen_flags: <defaults>
</compile_context>

<pallas_src>
import numpy as np
import jax
import jax.numpy as jnp
from jax.experimental import pallas as pl
from jax.experimental.pallas import tpu as pltpu


_WIN_SIZE = 11
_WIN_SIGMA = 1.5
_DATA_RANGE = 1.0
_K1, _K2 = 0.01, 0.03


def _fspecial_gauss_1d(size, sigma):
    coords = np.arange(size, dtype=np.float32)
    coords -= size // 2
    g = np.exp(-(coords ** 2) / (2.0 * sigma ** 2))
    g /= g.sum()
    return g  # (size,)


def _band_matrix(g, in_len):
    """M[o, o+k] = g[k]  ->  (in_len - size + 1, in_len) valid cross-correlation."""
    size = g.shape[0]
    out_len = in_len - size + 1
    m = np.zeros((out_len, in_len), dtype=np.float32)
    for o in range(out_len):
        m[o, o:o + size] = g
    return m


def _make_ssim_kernel(gauss, win_size, H, W, Ho, Wo):
    taps = [float(v) for v in gauss]        # compile-time scalar constants
    half = win_size // 2                    # Gaussian is symmetric: g[k] == g[n-1-k]
    C1 = (_K1 * _DATA_RANGE) ** 2
    C2 = (_K2 * _DATA_RANGE) ** 2

    def kernel(x_ref, y_ref, gw_ref, out_ref, t_ref):
        # x_ref / y_ref: (1, Cb, H, W); gw_ref: (W, Wo) band matrix;
        # out_ref: (1, 1, 1, Cb); t_ref: (5*Cb, H, Wo) VMEM scratch.
        cb = x_ref.shape[1]
        x = x_ref[0].astype(jnp.float32).reshape(cb * H, W)
        y = y_ref[0].astype(jnp.float32).reshape(cb * H, W)
        gw = gw_ref[...]

        # ---- W-axis (lane) blur on the MXU: band-matrix matmul per map,
        # streamed straight into the VMEM scratch (no value-level concat). ----
        def wblur(m, slot):
            t_ref[slot * cb:(slot + 1) * cb, :, :] = jnp.dot(
                m, gw, preferred_element_type=jnp.float32).reshape(cb, H, Wo)

        wblur(x, 0)
        wblur(y, 1)
        wblur(x * x, 2)
        wblur(y * y, 3)
        wblur(x * y, 4)

        # ---- H-axis (sublane) blur on the VPU: 11-tap shift-accumulate over
        # ref windows, symmetric taps folded, two partial accumulators. ----
        acc0 = taps[half] * t_ref[:, half:half + Ho, :]
        acc1 = taps[0] * (t_ref[:, 0:Ho, :]
                          + t_ref[:, win_size - 1:win_size - 1 + Ho, :])
        for k in range(1, half):
            pair = (t_ref[:, k:k + Ho, :]
                    + t_ref[:, win_size - 1 - k:win_size - 1 - k + Ho, :])
            if k % 2:
                acc1 = acc1 + taps[k] * pair
            else:
                acc0 = acc0 + taps[k] * pair
        b = acc0 + acc1                                  # (5*Cb, Ho, Wo)

        mu1 = b[0 * cb:1 * cb]
        mu2 = b[1 * cb:2 * cb]
        e_xx = b[2 * cb:3 * cb]
        e_yy = b[3 * cb:4 * cb]
        e_xy = b[4 * cb:5 * cb]

        mu1_sq = mu1 * mu1
        mu2_sq = mu2 * mu2
        mu1_mu2 = mu1 * mu2
        sigma1_sq = e_xx - mu1_sq
        sigma2_sq = e_yy - mu2_sq
        sigma12 = e_xy - mu1_mu2

        # Fused epilogue: single reciprocal per element on the EUP (+1 NR step).
        num = (2.0 * mu1_mu2 + C1) * (2.0 * sigma12 + C2)
        den = (mu1_sq + mu2_sq + C1) * (sigma1_sq + sigma2_sq + C2)
        r = pl.reciprocal(den, approx=True)
        r = r * (2.0 - den * r)                 # one Newton-Raphson refinement
        ssim_map = num * r                      # (Cb, Ho, Wo)

        # Sublane (Ho) reduce first, then a single lane (Wo) reduce.
        ssim_sum = jnp.sum(jnp.sum(ssim_map, axis=1), axis=-1)     # (Cb,)
        out_ref[...] = ssim_sum.reshape(1, 1, 1, cb)

    return kernel


def _choose_channel_tile(N, C, H, W, win_size):
    """Pick a channel tile Cb (dividing C) whose working set fits VMEM."""
    Ho, Wo = H - win_size + 1, W - win_size + 1
    bpe = 4

    # Generation-aware VMEM capacity (128 MiB on v5e/v6e, 64 MiB/TC on v7x).
    try:
        vmem_cap = int(getattr(pltpu.get_tpu_info(), "vmem_capacity_bytes", 0))
    except Exception:
        vmem_cap = 0
    if vmem_cap <= 0:
        vmem_cap = 64 << 20                       # conservative default
    budget = int(vmem_cap * 0.8)                  # headroom for Mosaic scratch

    def est(cb):
        in_blocks = 2 * 2 * cb * H * W            # x, y blocks, double-buffered
        gw_blocks = 2 * W * Wo                    # band matrix, double-buffered
        t_scr = 5 * cb * H * Wo                   # t_ref scratch (full lifetime)
        # Liveness: max over phases, not a flat sum of every temporary.
        phase_maps = 3 * cb * H * W + cb * H * Wo   # x, y, one product + mm result
        phase_hblur = 3 * 5 * cb * Ho * Wo          # two accumulators + pair temp
        phase_epi = 8 * cb * Ho * Wo                # b + epilogue temporaries
        live = max(phase_maps, phase_hblur, phase_epi)
        return (in_blocks + gw_blocks + t_scr + live) * bpe

    # Prefer >= 2 parallel grid points so both v7x TensorCores get work.
    min_grid = 2 if N * C >= 2 else 1
    cb_fallback, cb, have_fallback = 1, None, False
    for d in range(C, 0, -1):
        if C % d != 0 or est(d) > budget:
            continue
        if not have_fallback:
            cb_fallback, have_fallback = d, True
        if N * (C // d) >= min_grid:
            cb = d
            break
    if cb is None:
        cb = cb_fallback
    # TODO(synk): spatial (H) tiling with a (win_size-1)-pixel halo for images
    # so large that even a single channel exceeds the VMEM budget.
    vmem_limit = int(min(max(2 * est(cb), 32 << 20), budget))
    return cb, vmem_limit


def ssim_loss(x, y, *, win_size=_WIN_SIZE, win_sigma=_WIN_SIGMA):
    """1 - SSIM(x, y); x, y are (N, C, H, W) float32, data_range=1.0."""
    N, C, H, W = x.shape
    assert y.shape == x.shape
    # TODO(synk): PyTorch skips the blur along dims smaller than win_size; we
    # require H, W >= win_size instead.
    assert H >= win_size and W >= win_size, "spatial dims must be >= win_size"

    Ho, Wo = H - win_size + 1, W - win_size + 1
    g = _fspecial_gauss_1d(win_size, win_sigma)
    gw = jnp.asarray(_band_matrix(g, W).T)       # (W, Wo) band matrix for the MXU

    Cb, vmem_limit = _choose_channel_tile(N, C, H, W, win_size)
    Cg = C // Cb

    kernel = _make_ssim_kernel(g, win_size, H, W, Ho, Wo)

    ssim_sums = pl.pallas_call(
        kernel,
        out_shape=jax.ShapeDtypeStruct((N, Cg, 1, Cb), jnp.float32),
        grid_spec=pltpu.PrefetchScalarGridSpec(
            num_scalar_prefetch=0,
            grid=(N, Cg),
            in_specs=[
                pl.BlockSpec((1, Cb, H, W), lambda n, c: (n, c, 0, 0)),
                pl.BlockSpec((1, Cb, H, W), lambda n, c: (n, c, 0, 0)),
                pl.BlockSpec((W, Wo), lambda n, c: (0, 0)),
            ],
            out_specs=pl.BlockSpec((1, 1, 1, Cb), lambda n, c: (n, c, 0, 0)),
            scratch_shapes=[pltpu.VMEM((5 * Cb, H, Wo), jnp.float32)],
        ),
        compiler_params=pltpu.CompilerParams(
            dimension_semantics=("parallel", "parallel"),
            vmem_limit_bytes=vmem_limit,
        ),
    )(x, y, gw)

    ssim_per_channel = ssim_sums.reshape(N, C) / float(Ho * Wo)   # (N, C)
    return 1.0 - jnp.mean(ssim_per_channel)


def _ssim_loss_ref(x, y, *, win_size=_WIN_SIZE, win_sigma=_WIN_SIGMA):
    """Pure-JAX reference (band-matrix formulation) for sanity checking."""
    N, C, H, W = x.shape
    g = _fspecial_gauss_1d(win_size, win_sigma)
    gh = jnp.asarray(_band_matrix(g, H))
    gw = jnp.asarray(_band_matrix(g, W))

    def blur(a):
        t = jnp.einsum('oh,nchw->ncow', gh, a)
        return jnp.einsum('ncow,pw->ncop', t, gw)

    mu1, mu2 = blur(x), blur(y)
    s1 = blur(x * x) - mu1 ** 2
    s2 = blur(y * y) - mu2 ** 2
    s12 = blur(x * y) - mu1 * mu2
    C1, C2 = (_K1 * _DATA_RANGE) ** 2, (_K2 * _DATA_RANGE) ** 2
    cs = (2 * s12 + C2) / (s1 + s2 + C2)
    sm = (2 * mu1 * mu2 + C1) / (mu1 ** 2 + mu2 ** 2 + C1) * cs
    return 1.0 - jnp.mean(sm.reshape(N, C, -1).mean(-1))


if __name__ == "__main__":
    key = jax.random.PRNGKey(0)
    kx, ky = jax.random.split(key)
    N, C, H, W = 2, 4, 16, 16
    x = jax.random.uniform(kx, (N, C, H, W), dtype=jnp.float32)
    y = jax.random.uniform(ky, (N, C, H, W), dtype=jnp.float32)

    loss = jax.block_until_ready(ssim_loss(x, y))
    ref = jax.block_until_ready(_ssim_loss_ref(x, y))

    assert jnp.isfinite(loss), "SSIM loss is not finite"
    assert abs(float(loss) - float(ref)) < 1e-4, (float(loss), float(ref))
    print("KERNEL_OK")
</pallas_src>

<mosaic_0001>
module attributes {stable_mosaic.version = 11 : i64} {
  func.func @kernel(%arg0: i32, %arg1: i32, %arg2: memref<1x4x16x16xf32, #tpu.memory_space<vmem>>, %arg3: memref<1x4x16x16xf32, #tpu.memory_space<vmem>>, %arg4: memref<16x6xf32, #tpu.memory_space<vmem>>, %arg5: memref<1x1x1x4xf32, #tpu.memory_space<vmem>>, %arg6: memref<20x16x6xf32, #tpu.memory_space<vmem>>) attributes {dimension_semantics = [#tpu.dimension_semantics<parallel>, #tpu.dimension_semantics<parallel>], iteration_bounds = array<i64: 2, 1>, scalar_prefetch = 0 : i64, scratch_operands = 1 : i64, tpu.core_type = #tpu.core_type<tc>, window_params = [{transform_indices = @transform_0, window_bounds = array<i64: 1, 4, 16, 16>}, {transform_indices = @transform_1, window_bounds = array<i64: 1, 4, 16, 16>}, {pipeline_mode = #tpu.pipeline_mode<synchronous>, transform_indices = @transform_2, window_bounds = array<i64: 16, 6>}, {transform_indices = @transform_3, window_bounds = array<i64: 1, 1, 1, 4>}]} {
    %c0 = arith.constant 0 : index
    %c0_0 = arith.constant 0 : index
    %c0_1 = arith.constant 0 : index
    %c0_2 = arith.constant 0 : index
    %0 = vector.load %arg2[%c0, %c0_0, %c0_1, %c0_2] : memref<1x4x16x16xf32, #tpu.memory_space<vmem>>, vector<1x4x16x16xf32>
    %1 = vector.shape_cast %0 : vector<1x4x16x16xf32> to vector<4x16x16xf32>
    %2 = vector.shape_cast %1 : vector<4x16x16xf32> to vector<64x16xf32>
    %c0_3 = arith.constant 0 : index
    %c0_4 = arith.constant 0 : index
    %c0_5 = arith.constant 0 : index
    %c0_6 = arith.constant 0 : index
    %3 = vector.load %arg3[%c0_3, %c0_4, %c0_5, %c0_6] : memref<1x4x16x16xf32, #tpu.memory_space<vmem>>, vector<1x4x16x16xf32>
    %4 = vector.shape_cast %3 : vector<1x4x16x16xf32> to vector<4x16x16xf32>
    %5 = vector.shape_cast %4 : vector<4x16x16xf32> to vector<64x16xf32>
    %c0_7 = arith.constant 0 : index
    %c0_8 = arith.constant 0 : index
    %6 = vector.load %arg4[%c0_7, %c0_8] : memref<16x6xf32, #tpu.memory_space<vmem>>, vector<16x6xf32>
    %cst = arith.constant dense<0.000000e+00> : vector<64x6xf32>
    %7 = tpu.matmul %2, %6, %cst {dimension_numbers = #tpu.dot_dimension_numbers<[1], [0], [0], [1], [0, 0, 1, 1], [], []>} : vector<64x16xf32>, vector<16x6xf32>, vector<64x6xf32> -> vector<64x6xf32>
    %8 = vector.shape_cast %7 : vector<64x6xf32> to vector<4x16x6xf32>
    %c0_9 = arith.constant 0 : index
    %c0_10 = arith.constant 0 : index
    %c0_11 = arith.constant 0 : index
    %9 = vector.load %arg6[%c0_9, %c0_10, %c0_11] : memref<20x16x6xf32, #tpu.memory_space<vmem>>, vector<4x16x6xf32>
    tpu.vector_store %arg6[%c0_9, %c0_10, %c0_11], %8 {strides = array<i32>} : memref<20x16x6xf32, #tpu.memory_space<vmem>>, vector<4x16x6xf32>,
    %cst_12 = arith.constant dense<0.000000e+00> : vector<64x6xf32>
    %10 = tpu.matmul %5, %6, %cst_12 {dimension_numbers = #tpu.dot_dimension_numbers<[1], [0], [0], [1], [0, 0, 1, 1], [], []>} : vector<64x16xf32>, vector<16x6xf32>, vector<64x6xf32> -> vector<64x6xf32>
    %11 = vector.shape_cast %10 : vector<64x6xf32> to vector<4x16x6xf32>
    %c4 = arith.constant 4 : index
    %c0_13 = arith.constant 0 : index
    %c0_14 = arith.constant 0 : index
    %12 = vector.load %arg6[%c4, %c0_13, %c0_14] : memref<20x16x6xf32, #tpu.memory_space<vmem>>, vector<4x16x6xf32>
    tpu.vector_store %arg6[%c4, %c0_13, %c0_14], %11 {strides = array<i32>} : memref<20x16x6xf32, #tpu.memory_space<vmem>>, vector<4x16x6xf32>,
    %13 = arith.mulf %2, %2 : vector<64x16xf32>
    %cst_15 = arith.constant dense<0.000000e+00> : vector<64x6xf32>
    %14 = tpu.matmul %13, %6, %cst_15 {dimension_numbers = #tpu.dot_dimension_numbers<[1], [0], [0], [1], [0, 0, 1, 1], [], []>} : vector<64x16xf32>, vector<16x6xf32>, vector<64x6xf32> -> vector<64x6xf32>
    %15 = vector.shape_cast %14 : vector<64x6xf32> to vector<4x16x6xf32>
    %c8 = arith.constant 8 : index
    %c0_16 = arith.constant 0 : index
    %c0_17 = arith.constant 0 : index
    %16 = vector.load %arg6[%c8, %c0_16, %c0_17] : memref<20x16x6xf32, #tpu.memory_space<vmem>>, vector<4x16x6xf32>
    tpu.vector_store %arg6[%c8, %c0_16, %c0_17], %15 {strides = array<i32>} : memref<20x16x6xf32, #tpu.memory_space<vmem>>, vector<4x16x6xf32>,
    %17 = arith.mulf %5, %5 : vector<64x16xf32>
    %cst_18 = arith.constant dense<0.000000e+00> : vector<64x6xf32>
    %18 = tpu.matmul %17, %6, %cst_18 {dimension_numbers = #tpu.dot_dimension_numbers<[1], [0], [0], [1], [0, 0, 1, 1], [], []>} : vector<64x16xf32>, vector<16x6xf32>, vector<64x6xf32> -> vector<64x6xf32>
    %19 = vector.shape_cast %18 : vector<64x6xf32> to vector<4x16x6xf32>
    %c12 = arith.constant 12 : index
    %c0_19 = arith.constant 0 : index
    %c0_20 = arith.constant 0 : index
    %20 = vector.load %arg6[%c12, %c0_19, %c0_20] : memref<20x16x6xf32, #tpu.memory_space<vmem>>, vector<4x16x6xf32>
    tpu.vector_store %arg6[%c12, %c0_19, %c0_20], %19 {strides = array<i32>} : memref<20x16x6xf32, #tpu.memory_space<vmem>>, vector<4x16x6xf32>,
    %21 = arith.mulf %2, %5 : vector<64x16xf32>
    %cst_21 = arith.constant dense<0.000000e+00> : vector<64x6xf32>
    %22 = tpu.matmul %21, %6, %cst_21 {dimension_numbers = #tpu.dot_dimension_numbers<[1], [0], [0], [1], [0, 0, 1, 1], [], []>} : vector<64x16xf32>, vector<16x6xf32>, vector<64x6xf32> -> vector<64x6xf32>
    %23 = vector.shape_cast %22 : vector<64x6xf32> to vector<4x16x6xf32>
    %c16 = arith.constant 16 : index
    %c0_22 = arith.constant 0 : index
    %c0_23 = arith.constant 0 : index
    %24 = vector.load %arg6[%c16, %c0_22, %c0_23] : memref<20x16x6xf32, #tpu.memory_space<vmem>>, vector<4x16x6xf32>
    tpu.vector_store %arg6[%c16, %c0_22, %c0_23], %23 {strides = array<i32>} : memref<20x16x6xf32, #tpu.memory_space<vmem>>, vector<4x16x6xf32>,
    %c0_24 = arith.constant 0 : index
    %c5 = arith.constant 5 : index
    %c0_25 = arith.constant 0 : index
    %25 = vector.load %arg6[%c0_24, %c5, %c0_25] : memref<20x16x6xf32, #tpu.memory_space<vmem>>, vector<20x6x6xf32>
    %cst_26 = arith.constant 0.266011745 : f32
    %26 = vector.broadcast %cst_26 : f32 to vector<20x6x6xf32>
    %27 = arith.mulf %26, %25 : vector<20x6x6xf32>
    %c0_27 = arith.constant 0 : index
    %c0_28 = arith.constant 0 : index
    %c0_29 = arith.constant 0 : index
    %28 = vector.load %arg6[%c0_27, %c0_28, %c0_29] : memref<20x16x6xf32, #tpu.memory_space<vmem>>, vector<20x6x6xf32>
    %c0_30 = arith.constant 0 : index
    %c10 = arith.constant 10 : index
    %c0_31 = arith.constant 0 : index
    %29 = vector.load %arg6[%c0_30, %c10, %c0_31] : memref<20x16x6xf32, #tpu.memory_space<vmem>>, vector<20x6x6xf32>
    %30 = arith.addf %28, %29 : vector<20x6x6xf32>
    %cst_32 = arith.constant 0.00102838036 : f32
    %31 = vector.broadcast %cst_32 : f32 to vector<20x6x6xf32>
    %32 = arith.mulf %31, %30 : vector<20x6x6xf32>
    %c0_33 = arith.constant 0 : index
    %c1 = arith.constant 1 : index
    %c0_34 = arith.constant 0 : index
    %33 = vector.load %arg6[%c0_33, %c1, %c0_34] : memref<20x16x6xf32, #tpu.memory_space<vmem>>, vector<20x6x6xf32>
    %c0_35 = arith.constant 0 : index
    %c9 = arith.constant 9 : index
    %c0_36 = arith.constant 0 : index
    %34 = vector.load %arg6[%c0_35, %c9, %c0_36] : memref<20x16x6xf32, #tpu.memory_space<vmem>>, vector<20x6x6xf32>
    %35 = arith.addf %33, %34 : vector<20x6x6xf32>
    %cst_37 = arith.constant 0.00759875868 : f32
    %36 = vector.broadcast %cst_37 : f32 to vector<20x6x6xf32>
    %37 = arith.mulf %36, %35 : vector<20x6x6xf32>
    %38 = arith.addf %32, %37 : vector<20x6x6xf32>
    %c0_38 = arith.constant 0 : index
    %c2 = arith.constant 2 : index
    %c0_39 = arith.constant 0 : index
    %39 = vector.load %arg6[%c0_38, %c2, %c0_39] : memref<20x16x6xf32, #tpu.memory_space<vmem>>, vector<20x6x6xf32>
    %c0_40 = arith.constant 0 : index
    %c8_41 = arith.constant 8 : index
    %c0_42 = arith.constant 0 : index
    %40 = vector.load %arg6[%c0_40, %c8_41, %c0_42] : memref<20x16x6xf32, #tpu.memory_space<vmem>>, vector<20x6x6xf32>
    %41 = arith.addf %39, %40 : vector<20x6x6xf32>
    %cst_43 = arith.constant 0.0360007733 : f32
    %42 = vector.broadcast %cst_43 : f32 to vector<20x6x6xf32>
    %43 = arith.mulf %42, %41 : vector<20x6x6xf32>
    %44 = arith.addf %27, %43 : vector<20x6x6xf32>
    %c0_44 = arith.constant 0 : index
    %c3 = arith.constant 3 : index
    %c0_45 = arith.constant 0 : index
    %45 = vector.load %arg6[%c0_44, %c3, %c0_45] : memref<20x16x6xf32, #tpu.memory_space<vmem>>, vector<20x6x6xf32>
    %c0_46 = arith.constant 0 : index
    %c7 = arith.constant 7 : index
    %c0_47 = arith.constant 0 : index
    %46 = vector.load %arg6[%c0_46, %c7, %c0_47] : memref<20x16x6xf32, #tpu.memory_space<vmem>>, vector<20x6x6xf32>
    %47 = arith.addf %45, %46 : vector<20x6x6xf32>
    %cst_48 = arith.constant 0.109360702 : f32
    %48 = vector.broadcast %cst_48 : f32 to vector<20x6x6xf32>
    %49 = arith.mulf %48, %47 : vector<20x6x6xf32>
    %50 = arith.addf %38, %49 : vector<20x6x6xf32>
    %c0_49 = arith.constant 0 : index
    %c4_50 = arith.constant 4 : index
    %c0_51 = arith.constant 0 : index
    %51 = vector.load %arg6[%c0_49, %c4_50, %c0_51] : memref<20x16x6xf32, #tpu.memory_space<vmem>>, vector<20x6x6xf32>
    %c0_52 = arith.constant 0 : index
    %c6 = arith.constant 6 : index
    %c0_53 = arith.constant 0 : index
    %52 = vector.load %arg6[%c0_52, %c6, %c0_53] : memref<20x16x6xf32, #tpu.memory_space<vmem>>, vector<20x6x6xf32>
    %53 = arith.addf %51, %52 : vector<20x6x6xf32>
    %cst_54 = arith.constant 0.213005543 : f32
    %54 = vector.broadcast %cst_54 : f32 to vector<20x6x6xf32>
    %55 = arith.mulf %54, %53 : vector<20x6x6xf32>
    %56 = arith.addf %44, %55 : vector<20x6x6xf32>
    %57 = arith.addf %56, %50 : vector<20x6x6xf32>
    %58 = vector.extract_strided_slice %57 {offsets = [0, 0, 0], sizes = [4, 6, 6], strides = [1, 1, 1]} : vector<20x6x6xf32> to vector<4x6x6xf32>
    %59 = vector.extract_strided_slice %57 {offsets = [4, 0, 0], sizes = [4, 6, 6], strides = [1, 1, 1]} : vector<20x6x6xf32> to vector<4x6x6xf32>
    %60 = vector.extract_strided_slice %57 {offsets = [8, 0, 0], sizes = [4, 6, 6], strides = [1, 1, 1]} : vector<20x6x6xf32> to vector<4x6x6xf32>
    %61 = vector.extract_strided_slice %57 {offsets = [12, 0, 0], sizes = [4, 6, 6], strides = [1, 1, 1]} : vector<20x6x6xf32> to vector<4x6x6xf32>
    %62 = vector.extract_strided_slice %57 {offsets = [16, 0, 0], sizes = [4, 6, 6], strides = [1, 1, 1]} : vector<20x6x6xf32> to vector<4x6x6xf32>
    %63 = arith.mulf %58, %58 : vector<4x6x6xf32>
    %64 = arith.mulf %59, %59 : vector<4x6x6xf32>
    %65 = arith.mulf %58, %59 : vector<4x6x6xf32>
    %66 = arith.subf %60, %63 : vector<4x6x6xf32>
    %67 = arith.subf %61, %64 : vector<4x6x6xf32>
    %68 = arith.subf %62, %65 : vector<4x6x6xf32>
    %cst_55 = arith.constant 2.000000e+00 : f32
    %69 = vector.broadcast %cst_55 : f32 to vector<4x6x6xf32>
    %70 = arith.mulf %69, %65 : vector<4x6x6xf32>
    %cst_56 = arith.constant 9.99999974E-5 : f32
    %71 = vector.broadcast %cst_56 : f32 to vector<4x6x6xf32>
    %72 = arith.addf %70, %71 : vector<4x6x6xf32>
    %cst_57 = arith.constant 2.000000e+00 : f32
    %73 = vector.broadcast %cst_57 : f32 to vector<4x6x6xf32>
    %74 = arith.mulf %73, %68 : vector<4x6x6xf32>
    %cst_58 = arith.constant 8.99999984E-4 : f32
    %75 = vector.broadcast %cst_58 : f32 to vector<4x6x6xf32>
    %76 = arith.addf %74, %75 : vector<4x6x6xf32>
    %77 = arith.mulf %72, %76 : vector<4x6x6xf32>
    %78 = arith.addf %63, %64 : vector<4x6x6xf32>
    %cst_59 = arith.constant 9.99999974E-5 : f32
    %79 = vector.broadcast %cst_59 : f32 to vector<4x6x6xf32>
    %80 = arith.addf %78, %79 : vector<4x6x6xf32>
    %81 = arith.addf %66, %67 : vector<4x6x6xf32>
    %cst_60 = arith.constant 8.99999984E-4 : f32
    %82 = vector.broadcast %cst_60 : f32 to vector<4x6x6xf32>
    %83 = arith.addf %81, %82 : vector<4x6x6xf32>
    %84 = arith.mulf %80, %83 : vector<4x6x6xf32>
    %85 = tpu.reciprocal %84 {approx = true} : vector<4x6x6xf32> -> vector<4x6x6xf32>
    %86 = arith.mulf %84, %85 : vector<4x6x6xf32>
    %cst_61 = arith.constant 2.000000e+00 : f32
    %87 = vector.broadcast %cst_61 : f32 to vector<4x6x6xf32>
    %88 = arith.subf %87, %86 : vector<4x6x6xf32>
    %89 = arith.mulf %85, %88 : vector<4x6x6xf32>
    %90 = arith.mulf %77, %89 : vector<4x6x6xf32>
    %cst_62 = arith.constant dense<0.000000e+00> : vector<4x6xf32>
    %91 = vector.multi_reduction <add>, %90, %cst_62 [1] : vector<4x6x6xf32> to vector<4x6xf32>
    %cst_63 = arith.constant dense<0.000000e+00> : vector<4xf32>
    %92 = vector.multi_reduction <add>, %91, %cst_63 [1] : vector<4x6xf32> to vector<4xf32>
    %93 = vector.shape_cast %92 : vector<4xf32> to vector<1x1x1x4xf32>
    %c0_64 = arith.constant 0 : index
    %c0_65 = arith.constant 0 : index
    %c0_66 = arith.constant 0 : index
    %c0_67 = arith.constant 0 : index
    %94 = vector.load %arg5[%c0_64, %c0_65, %c0_66, %c0_67] : memref<1x1x1x4xf32, #tpu.memory_space<vmem>>, vector<1x1x1x4xf32>
    tpu.vector_store %arg5[%c0_64, %c0_65, %c0_66, %c0_67], %93 {strides = array<i32>} : memref<1x1x1x4xf32, #tpu.memory_space<vmem>>, vector<1x1x1x4xf32>,
    return
  }
  func.func @transform_0(%arg0: i32, %arg1: i32) -> (i32, i32, i32, i32) {
    %c0_i32 = arith.constant 0 : i32
    %c0_i32_0 = arith.constant 0 : i32
    %c0_i32_1 = arith.constant 0 : i32
    return %arg0, %arg1, %c0_i32, %c0_i32_0 : i32, i32, i32, i32
  }
  func.func @transform_1(%arg0: i32, %arg1: i32) -> (i32, i32, i32, i32) {
    %c0_i32 = arith.constant 0 : i32
    %c0_i32_0 = arith.constant 0 : i32
    %c0_i32_1 = arith.constant 0 : i32
    return %arg0, %arg1, %c0_i32, %c0_i32_0 : i32, i32, i32, i32
  }
  func.func @transform_2(%arg0: i32, %arg1: i32) -> (i32, i32) {
    %c0_i32 = arith.constant 0 : i32
    %c0_i32_0 = arith.constant 0 : i32
    %c0_i32_1 = arith.constant 0 : i32
    return %c0_i32, %c0_i32_0 : i32, i32
  }
  func.func @transform_3(%arg0: i32, %arg1: i32) -> (i32, i32, i32, i32) {
    %c0_i32 = arith.constant 0 : i32
    %c0_i32_0 = arith.constant 0 : i32
    %c0_i32_1 = arith.constant 0 : i32
    return %arg0, %arg1, %c0_i32, %c0_i32_0 : i32, i32, i32, i32
  }
}

</mosaic_0001>

<llo_original>
// kernel: tpu_custom_call.1
$region0: #{tpu_custom_call.1}
  #allocation0 [shape = 'u32[]', space=smem, size = 0x4, offset = 0x4, fixed_abs, tag = 'smem constant byte address 0x4 - core index']
  #allocation1 [shape = 'u32[144,128]{1,0:T(1,128)}', space=vmem, size = 0x12000, scoped, tag = 'internal scratch']
  #allocation2 [shape = 'f32[20,16,6]{2,1,0:T(8,128)}', space=vmem, size = 0x28000, scoped, tag = 'scratch operand']
  %s0 = inlined_call_operand.hbm [shape: f32[2,4,16,16], index: 0, kind: input, shape index: {}]
  %s1 = inlined_call_operand.hbm [shape: f32[2,4,16,16], index: 1, kind: input, shape index: {}]
  %s2 = inlined_call_operand.vmem [shape: f32[16,6], index: 2, kind: input, shape index: {}]
  %s3 = inlined_call_operand.hbm [shape: f32[2,1,1,4], index: 3, kind: output, shape index: {}]
  %s4 = sld [smem:[#allocation0]]
  $region53: #{tpu_custom_call.1} parent=0
    _
  %s6 = ssub.s32 1, %s4
  %s7 = scalar_select 0, %s6, %s4
  $region1: #{tpu_custom_call.1} parent=0
    #allocation3 [shape = 'u8[65536]{0}', space=vmem, size = 0x10000, scoped, tag = 'input window, operand 0']
    #allocation4 [shape = 's32[2]{0}', space=sflag, size = 0x8, scoped, tag = 'scoped memory for tpu_custom_call.1']
    #allocation5 [shape = 's32[2]{0}', space=sflag, size = 0x8, scoped, tag = 'scoped memory for tpu_custom_call.1']
    #allocation6 [shape = 'u8[65536]{0}', space=vmem, size = 0x10000, scoped, tag = 'input window, operand 1']
    #allocation7 [shape = 's32[2]{0}', space=sflag, size = 0x8, scoped, tag = 'scoped memory for tpu_custom_call.1']
    #allocation8 [shape = 'u8[1024]{0}', space=vmem, size = 0x400, scoped, tag = 'output window, operand 0']
    %8 = vsyncpa [#allocation4], 0
    %s9 = scalar_lea.sflag [#allocation4], 1
    %10 = vsyncpa %s9, 0
    %11 = vsyncpa [#allocation7], 0
    %s12 = scalar_lea.sflag [#allocation7], 1
    %13 = vsyncpa %s12, 0
    %14 = vsyncpa [#allocation5], 0
    %s15 = scalar_lea.sflag [#allocation5], 1
    %16 = vsyncpa %s15, 0
    loop: start=0, step=1, limit=4
    $region2: #{tpu_custom_call.1} parent=1 // loop_pre_header
      _
    $region3: #{tpu_custom_call.1} parent=1 // loop_header
      %s18 = sphi 0, %s22
      %p19 = scmp.ge.s32.totalorder %s18, 4
      %s25 = sphi 0, %s37
      %s26 = sphi 0, %s33
      %s27 = sphi 0, %s25
      %s28 = sphi 0, %s26
      %s29 = sphi 0, %s27
      %s30 = sphi 0, %s28
      %s42 = sphi 0, %s44
      %s45 = sphi 0, %s42
      %s46 = sphi 0, %s45
      %s62 = sphi 0, %s46
      %s70 = sphi 0, %s72
      %s73 = sphi 0, %s70
      %s74 = sphi 0, %s73
      %s90 = sphi 0, %s74
      %s94 = sphi 0, %s94
      %s96 = sphi 0, %s94
      %s97 = sphi 0, %s96
      %s111 = sphi 0, %s97
      %s119 = sphi 0, %s121
      %s122 = sphi 0, %s119
      %s123 = sphi 0, %s122
      %s139 = sphi 0, %s123
    $region4: #{tpu_custom_call.1} parent=1 // loop_header_branch
      %21 = sbr.rel (%p19) target = $region8
    $region5: #{tpu_custom_call.1} parent=1 // loop_body
      %s23 = ssub.s32 %s18, 1
      %s24 = ssub.s32 %s18, 2
      %s31 = sadd.s32 1, %s26
      %p32 = scmp.ge.s32.totalorder %s31, 1
      %s33 = scalar_select %p32, 0, %s31
      %s34 = sadd.s32 1, %s25
      %s35 = scalar_select %p32, %s34, %s25
      %p36 = scmp.ge.s32.totalorder %s35, 2
      %s37 = scalar_select %p36, 0, %s35
      %s38 = ssub.s32 %s25, %s37
      %s39 = ssub.s32 %s26, %s33
      %s40 = sor.u32 %s38, %s39
      %p41 = scmp.eq.s32.totalorder %s40, 0
      %s43 = sadd.s32 %s42, 1
      %s44 = scalar_select %p41, %s42, %s43
      %p47 = pneg %p41
      %p48 = scmp.eq.s32.totalorder %s18, 1
      %p49 = por %p47, %p48
      %p50 = scmp.ne.s32.totalorder %s42, %s45
      %p51 = scmp.eq.s32.totalorder %s18, 0
      %p52 = por %p50, %p51
      %p53 = scmp.ne.s32.totalorder %s42, %s45
      %p54 = scmp.eq.s32.totalorder %s23, 1
      %p55 = por %p53, %p54
      %p56 = scmp.ne.s32.totalorder %s45, %s46
      %p57 = scmp.eq.s32.totalorder %s23, 0
      %p58 = por %p56, %p57
      %p59 = scmp.ne.s32.totalorder %s45, %s46
      %p60 = scmp.eq.s32.totalorder %s24, 1
      %p61 = por %p59, %p60
      %p63 = scmp.ne.s32.totalorder %s46, %s62
      %p64 = scmp.eq.s32.totalorder %s24, 0
      %p65 = por %p63, %p64
      %s66 = ssub.s32 %s25, %s37
      %s67 = ssub.s32 %s26, %s33
      %s68 = sor.u32 %s66, %s67
      %p69 = scmp.eq.s32.totalorder %s68, 0
      %s71 = sadd.s32 %s70, 1
      %s72 = scalar_select %p69, %s70, %s71
      %p75 = pneg %p69
      %p76 = scmp.eq.s32.totalorder %s18, 1
      %p77 = por %p75, %p76
      %p78 = scmp.ne.s32.totalorder %s70, %s73
      %p79 = scmp.eq.s32.totalorder %s18, 0
      %p80 = por %p78, %p79
      %p81 = scmp.ne.s32.totalorder %s70, %s73
      %p82 = scmp.eq.s32.totalorder %s23, 1
      %p83 = por %p81, %p82
      %p84 = scmp.ne.s32.totalorder %s73, %s74
      %p85 = scmp.eq.s32.totalorder %s23, 0
      %p86 = por %p84, %p85
      %p87 = scmp.ne.s32.totalorder %s73, %s74
      %p88 = scmp.eq.s32.totalorder %s24, 1
      %p89 = por %p87, %p88
      %p91 = scmp.ne.s32.totalorder %s74, %s90
      %p92 = scmp.eq.s32.totalorder %s24, 0
      %p93 = por %p91, %p92
      %s95 = sadd.s32 %s94, 1
      %p98 = scmp.eq.s32.totalorder %s18, 1
      %p99 = scmp.ne.s32.totalorder %s94, %s96
      %p100 = scmp.eq.s32.totalorder %s18, 0
      %p101 = por %p99, %p100
      %p102 = scmp.ne.s32.totalorder %s94, %s96
      %p103 = scmp.eq.s32.totalorder %s23, 1
      %p104 = por %p102, %p103
      %p105 = scmp.ne.s32.totalorder %s96, %s97
      %p106 = scmp.eq.s32.totalorder %s23, 0
      %p107 = por %p105, %p106
      %p108 = scmp.ne.s32.totalorder %s96, %s97
      %p109 = scmp.eq.s32.totalorder %s24, 1
      %p110 = por %p108, %p109
      %p112 = scmp.ne.s32.totalorder %s97, %s111
      %p113 = scmp.eq.s32.totalorder %s24, 0
      %p114 = por %p112, %p113
      %s115 = ssub.s32 %s25, %s37
      %s116 = ssub.s32 %s26, %s33
      %s117 = sor.u32 %s115, %s116
      %p118 = scmp.eq.s32.totalorder %s117, 0
      %s120 = sadd.s32 %s119, 1
      %s121 = scalar_select %p118, %s119, %s120
      %p124 = pneg %p118
      %p125 = scmp.eq.s32.totalorder %s18, 1
      %p126 = por %p124, %p125
      %p127 = scmp.ne.s32.totalorder %s119, %s122
      %p128 = scmp.eq.s32.totalorder %s18, 0
      %p129 = por %p127, %p128
      %p130 = scmp.ne.s32.totalorder %s119, %s122
      %p131 = scmp.eq.s32.totalorder %s23, 1
      %p132 = por %p130, %p131
      %p133 = scmp.ne.s32.totalorder %s122, %s123
      %p134 = scmp.eq.s32.totalorder %s23, 0
      %p135 = por %p133, %p134
      %p136 = scmp.ne.s32.totalorder %s122, %s123
      %p137 = scmp.eq.s32.totalorder %s24, 1
      %p138 = por %p136, %p137
      %p140 = scmp.ne.s32.totalorder %s123, %s139
      %p141 = scmp.eq.s32.totalorder %s24, 0
      %p142 = por %p140, %p141
      %p143 = scmp.le.s32.totalorder 1, %s18
      %p144 = scmp.lt.s32.totalorder %s18, 3
      %p145 = pnand %p143, %p144
      %p146 = pneg %p145
      // Predicated region
      $region9: #{tpu_custom_call.1} parent=5 // pred_check
        _
      $region10: #{tpu_custom_call.1} parent=5 // pred_check_branch
        %148 = sbr.rel (%p145) target = $region12
      $region11: #{tpu_custom_call.1} parent=5 // pred_region
        %s149 = ssub.s32 %s18, 1
        // Predicated region
        $region13: #{tpu_custom_call.1} parent=11 // pred_check
          %p150 = pneg %p107
        $region14: #{tpu_custom_call.1} parent=11 // pred_check_branch
          %152 = sbr.rel (%p150) target = $region16
        $region15: #{tpu_custom_call.1} parent=11 // pred_region
          _
        $region16: #{tpu_custom_call.1} parent=11 // pred_fallthru
          _
      $region12: #{tpu_custom_call.1} parent=5 // pred_fallthru
        _
      %p153 = scmp.lt.s32.totalorder %s18, 2
      // Predicated region
      $region17: #{tpu_custom_call.1} parent=5 // pred_check
        %p154 = pneg %p153
      $region18: #{tpu_custom_call.1} parent=5 // pred_check_branch
        %156 = sbr.rel (%p154) target = $region20
      $region19: #{tpu_custom_call.1} parent=5 // pred_region
        // Predicated region
        $region21: #{tpu_custom_call.1} parent=19 // pred_check
          %p157 = pneg %p52
        $region22: #{tpu_custom_call.1} parent=19 // pred_check_branch
          %159 = sbr.rel (%p157) target = $region24
        $region23: #{tpu_custom_call.1} parent=19 // pred_region
          %s160 = sand.u32 %s42, 1
          %s161 = scalar_lea.sflag [#allocation4], %s160
          %s162 = sand.u32 %s42, 1
          %s163 = smul.addr %s162, 64
          %s164 = scalar_lea.vmem [#allocation3], %s163
          %s165 = smul.u32 4, %s26
          %s167 = ssub.s32 1024, 1024
          %168 = vsyncadd %s161, %s167
          %s169 = smul.addr %s165, 2
          %s170 = smul.addr %s25, 8
          %s171 = sadd.s32 %s169, %s170
          %s172 = smul.addr %s171, 128
          %s173 = scalar_lea.hbm %s0, %s172
          %s174 = sshll.u32 %s164, 4
          %s175 = int_to_ptr.vmem [resolvable:$true] %s174
          %180 = dma.hbm_to_vmem [thread:$0]  %s173, 1024, %s175, %s161, 128, 128, 8
        $region24: #{tpu_custom_call.1} parent=19 // pred_fallthru
          _
        // Predicated region
        $region25: #{tpu_custom_call.1} parent=19 // pred_check
          %p181 = pneg %p80
        $region26: #{tpu_custom_call.1} parent=19 // pred_check_branch
          %183 = sbr.rel (%p181) target = $region28
        $region27: #{tpu_custom_call.1} parent=19 // pred_region
          %s184 = sand.u32 %s70, 1
          %s185 = scalar_lea.sflag [#allocation7], %s184
          %s186 = sand.u32 %s70, 1
          %s187 = smul.addr %s186, 64
          %s188 = scalar_lea.vmem [#allocation6], %s187
          %s189 = smul.u32 4, %s26
          %s191 = ssub.s32 1024, 1024
          %192 = vsyncadd %s185, %s191
          %s193 = smul.addr %s189, 2
          %s194 = smul.addr %s25, 8
          %s195 = sadd.s32 %s193, %s194
          %s196 = smul.addr %s195, 128
          %s197 = scalar_lea.hbm %s1, %s196
          %s198 = sshll.u32 %s188, 4
          %s199 = int_to_ptr.vmem [resolvable:$true] %s198
          %204 = dma.hbm_to_vmem [thread:$0]  %s197, 1024, %s199, %s185, 128, 128, 8
        $region28: #{tpu_custom_call.1} parent=19 // pred_fallthru
          _
      $region20: #{tpu_custom_call.1} parent=5 // pred_fallthru
        _
      %p205 = scmp.le.s32.totalorder 1, %s18
      %p206 = scmp.lt.s32.totalorder %s18, 3
      %p207 = pnand %p205, %p206
      %p208 = pneg %p207
      // Predicated region
      $region29: #{tpu_custom_call.1} parent=5 // pred_check
        _
      $region30: #{tpu_custom_call.1} parent=5 // pred_check_branch
        %210 = sbr.rel (%p207) target = $region32
      $region31: #{tpu_custom_call.1} parent=5 // pred_region
        %s211 = ssub.s32 %s18, 1
        %s212 = sand.u32 %s45, 1
        %s213 = scalar_lea.sflag [#allocation4], %s212
        %s214 = sand.u32 %s45, 1
        %s215 = smul.addr %s214, 64
        %s216 = scalar_lea.vmem [#allocation3], %s215
        // Predicated region
        $region33: #{tpu_custom_call.1} parent=31 // pred_check
          %p217 = pneg %p58
        $region34: #{tpu_custom_call.1} parent=31 // pred_check_branch
          %219 = sbr.rel (%p217) target = $region36
        $region35: #{tpu_custom_call.1} parent=31 // pred_region
          %220 = dma.done %s213, 1024
        $region36: #{tpu_custom_call.1} parent=31 // pred_fallthru
          _
        %s221 = sand.u32 %s73, 1
        %s222 = scalar_lea.sflag [#allocation7], %s221
        %s223 = sand.u32 %s73, 1
        %s224 = smul.addr %s223, 64
        %s225 = scalar_lea.vmem [#allocation6], %s224
        // Predicated region
        $region37: #{tpu_custom_call.1} parent=31 // pred_check
          %p226 = pneg %p86
        $region38: #{tpu_custom_call.1} parent=31 // pred_check_branch
          %228 = sbr.rel (%p226) target = $region40
        $region39: #{tpu_custom_call.1} parent=31 // pred_region
          %229 = dma.done %s222, 1024
        $region40: #{tpu_custom_call.1} parent=31 // pred_fallthru
          _
        %s230 = sand.u32 %s45, 1
        %s231 = scalar_lea.sflag [#allocation4], %s230
        %s232 = sand.u32 %s45, 1
        %s233 = smul.addr %s232, 64
        %s234 = scalar_lea.vmem [#allocation3], %s233
        %p235 = pneg %p58
        %p236 = pneg %p55
        %s237 = sand.u32 %s73, 1
        %s238 = scalar_lea.sflag [#allocation7], %s237
        %s239 = sand.u32 %s73, 1
        %s240 = smul.addr %s239, 64
        %s241 = scalar_lea.vmem [#allocation6], %s240
        %p242 = pneg %p86
        %p243 = pneg %p83
        %p244 = pneg %p107
        %p245 = pneg %p104
        %p246 = pneg %p135
        %p247 = pneg %p132
        %s248 = sand.u32 %s122, 1
        %s249 = scalar_lea.sflag [#allocation5], %s248
        %s250 = sand.u32 %s122, 1
        %s251 = scalar_lea.vmem [#allocation8], %s250
        %s252 = smul.u32 4, %s28
        %s253 = smul.u32 4, %s28
        %v254 = vld [vmem:[%s216] sm:$0xff]
        %v255 = vld [vmem:[%s216 + $0x8] sm:$0xff]
        %v256 = vld [vmem:[%s216 + $0x10] sm:$0xff]
        %v257 = vld [vmem:[%s216 + $0x18] sm:$0xff]
        %v258 = vld [vmem:[%s216 + $0x20] sm:$0xff]
        %v259 = vld [vmem:[%s216 + $0x28] sm:$0xff]
        %v260 = vld [vmem:[%s216 + $0x30] sm:$0xff]
        %v261 = vld [vmem:[%s216 + $0x38] sm:$0xff]
        %v262 = vld [vmem:[%s225] sm:$0xff]
        %v263 = vld [vmem:[%s225 + $0x8] sm:$0xff]
        %v264 = vld [vmem:[%s225 + $0x10] sm:$0xff]
        %v265 = vld [vmem:[%s225 + $0x18] sm:$0xff]
        %v266 = vld [vmem:[%s225 + $0x20] sm:$0xff]
        %v267 = vld [vmem:[%s225 + $0x28] sm:$0xff]
        %v268 = vld [vmem:[%s225 + $0x30] sm:$0xff]
        %v269 = vld [vmem:[%s225 + $0x38] sm:$0xff]
        %v270 = vld [vmem:[%s2] sm:$0xff]
        %v271 = vld [vmem:[%s2 + $0x8] sm:$0xff]
        %vm272 = vcmask 130048
        %v274 = vsel %vm272, %v254, 0
        %v277 = vsel %vm272, %v255, 0
        %v280 = vsel %vm272, %v256, 0
        %v283 = vsel %vm272, %v257, 0
        %v286 = vsel %vm272, %v258, 0
        %v289 = vsel %vm272, %v259, 0
        %v292 = vsel %vm272, %v260, 0
        %v295 = vsel %vm272, %v261, 0
        %297 = vmatprep.subr.mxu0 0.0
        %298 = vmatpush1.msra.mxu0 0.0
        %299 = vmatprep.subr.mxu0 0.0
        %300 = vmatpush1.msra.mxu0 0.0
        %301 = vmatprep.subr.mxu0 0.0
        %302 = vmatpush1.msra.mxu0 0.0
        %303 = vmatprep.subr.mxu0 0.0
        %304 = vmatpush1.msra.mxu0 0.0
        %305 = vmatprep.subr.mxu0 0.0
        %306 = vmatpush1.msra.mxu0 0.0
        %307 = vmatprep.subr.mxu0 0.0
        %308 = vmatpush1.msra.mxu0 0.0
        %309 = vmatprep.subr.mxu0 0.0
        %310 = vmatpush1.msra.mxu0 0.0
        %311 = vmatprep.subr.mxu0 0.0
        %312 = vmatpush1.msra.mxu0 0.0
        %313 = vmatprep.subr.mxu0 0.0
        %314 = vmatpush1.msra.mxu0 0.0
        %315 = vmatprep.subr.mxu0 0.0
        %316 = vmatpush1.msra.mxu0 0.0
        %317 = vmatprep.subr.mxu0 0.0
        %318 = vmatpush1.msra.mxu0 0.0
        %319 = vmatprep.subr.mxu0 0.0
        %320 = vmatpush1.msra.mxu0 0.0
        %321 = vmatprep.subr.mxu0 0.0
        %322 = vmatpush1.msra.mxu0 0.0
        %323 = vmatprep.subr.mxu0 0.0
        %324 = vmatpush1.msra.mxu0 0.0
        %325 = vmatprep.subr.mxu0 0.0
        %326 = vmatpush1.msra.mxu0 %v271
        %327 = vmatprep.subr.mxu0 0.0
        %328 = vmatpush1.msra.mxu0 %v270
        %329 = vmatprep.subr.mxu0 0.0
        %330 = vmatpush2.msra.mxu0 0.0
        %331 = vmatprep.subr.mxu0 0.0
        %332 = vmatpush2.msra.mxu0 0.0
        %333 = vmatprep.subr.mxu0 0.0
        %334 = vmatpush2.msra.mxu0 0.0
        %335 = vmatprep.subr.mxu0 0.0
        %336 = vmatpush2.msra.mxu0 0.0
        %337 = vmatprep.subr.mxu0 0.0
        %338 = vmatpush2.msra.mxu0 0.0
        %339 = vmatprep.subr.mxu0 0.0
        %340 = vmatpush2.msra.mxu0 0.0
        %341 = vmatprep.subr.mxu0 0.0
        %342 = vmatpush2.msra.mxu0 0.0
        %343 = vmatprep.subr.mxu0 0.0
        %344 = vmatpush2.msra.mxu0 0.0
        %345 = vmatprep.subr.mxu0 0.0
        %346 = vmatpush2.msra.mxu0 0.0
        %347 = vmatprep.subr.mxu0 0.0
        %348 = vmatpush2.msra.mxu0 0.0
        %349 = vmatprep.subr.mxu0 0.0
        %350 = vmatpush2.msra.mxu0 0.0
        %351 = vmatprep.subr.mxu0 0.0
        %352 = vmatpush2.msra.mxu0 0.0
        %353 = vmatprep.subr.mxu0 0.0
        %354 = vmatpush2.msra.mxu0 0.0
        %355 = vmatprep.subr.mxu0 0.0
        %356 = vmatpush2.msra.mxu0 0.0
        %357 = vmatprep.subr.mxu0 0.0
        %358 = vmatpush2.msra.mxu0 0.0
        %359 = vmatprep.subr.mxu0 0.0
        %360 = vmatpush2.msra.mxu0 0.0
        %361 = vmatprep.mubr.f32.mxu0 0.0
        %362 = vmatmul.mubr.f32.gmra.mxu0 %v274
        %v363 = vpop.f32.mrf.mxu0
        %v364 = vadd.f32 0.0, %v363
        %v365 = vpop.f32.mrf.mxu0
        %366 = vmatprep.mubr.f32.mxu0 0.0
        %367 = vmatmul.mubr.f32.gmra.mxu0 %v277
        %v368 = vpop.f32.mrf.mxu0
        %v369 = vadd.f32 0.0, %v368
        %v370 = vpop.f32.mrf.mxu0
        %371 = vmatprep.mubr.f32.mxu0 0.0
        %372 = vmatmul.mubr.f32.gmra.mxu0 %v280
        %v373 = vpop.f32.mrf.mxu0
        %v374 = vadd.f32 0.0, %v373
        %v375 = vpop.f32.mrf.mxu0
        %376 = vmatprep.mubr.f32.mxu0 0.0
        %377 = vmatmul.mubr.f32.gmra.mxu0 %v283
        %v378 = vpop.f32.mrf.mxu0
        %v379 = vadd.f32 0.0, %v378
        %v380 = vpop.f32.mrf.mxu0
        %381 = vmatprep.mubr.f32.mxu0 0.0
        %382 = vmatmul.mubr.f32.gmra.mxu0 %v286
        %v383 = vpop.f32.mrf.mxu0
        %v384 = vadd.f32 0.0, %v383
        %v385 = vpop.f32.mrf.mxu0
        %386 = vmatprep.mubr.f32.mxu0 0.0
        %387 = vmatmul.mubr.f32.gmra.mxu0 %v289
        %v388 = vpop.f32.mrf.mxu0
        %v389 = vadd.f32 0.0, %v388
        %v390 = vpop.f32.mrf.mxu0
        %391 = vmatprep.mubr.f32.mxu0 0.0
        %392 = vmatmul.mubr.f32.gmra.mxu0 %v292
        %v393 = vpop.f32.mrf.mxu0
        %v394 = vadd.f32 0.0, %v393
        %v395 = vpop.f32.mrf.mxu0
        %396 = vmatprep.mubr.f32.mxu0 0.0
        %397 = vmatmul.mubr.f32.gmra.mxu0 %v295
        %v398 = vpop.f32.mrf.mxu0
        %v399 = vadd.f32 0.0, %v398
        %v400 = vpop.f32.mrf.mxu0
        %401 = vdwg.mxu0
        %vm402 = vcmask 48128
        %403 = vst.msk [vmem:[#allocation2] sm:$0xff] %vm402, %v364
        %404 = vst.msk [vmem:[#allocation2 + $0x8] sm:$0xff] %vm402, %v369
        %405 = vst.msk [vmem:[#allocation2 + $0x10] sm:$0xff] %vm402, %v374
        %406 = vst.msk [vmem:[#allocation2 + $0x18] sm:$0xff] %vm402, %v379
        %407 = vst.msk [vmem:[#allocation2 + $0x20] sm:$0xff] %vm402, %v384
        %408 = vst.msk [vmem:[#allocation2 + $0x28] sm:$0xff] %vm402, %v389
        %409 = vst.msk [vmem:[#allocation2 + $0x30] sm:$0xff] %vm402, %v394
        %410 = vst.msk [vmem:[#allocation2 + $0x38] sm:$0xff] %vm402, %v399
        %v412 = vsel %vm272, %v262, 0
        %v415 = vsel %vm272, %v263, 0
        %v418 = vsel %vm272, %v264, 0
        %v421 = vsel %vm272, %v265, 0
        %v424 = vsel %vm272, %v266, 0
        %v427 = vsel %vm272, %v267, 0
        %v430 = vsel %vm272, %v268, 0
        %v433 = vsel %vm272, %v269, 0
        %435 = vmatprep.subr.mxu0 0.0
        %436 = vmatpush1.msra.mxu0 0.0
        %437 = vmatprep.subr.mxu0 0.0
        %438 = vmatpush1.msra.mxu0 0.0
        %439 = vmatprep.subr.mxu0 0.0
        %440 = vmatpush1.msra.mxu0 0.0
        %441 = vmatprep.subr.mxu0 0.0
        %442 = vmatpush1.msra.mxu0 0.0
        %443 = vmatprep.subr.mxu0 0.0
        %444 = vmatpush1.msra.mxu0 0.0
        %445 = vmatprep.subr.mxu0 0.0
        %446 = vmatpush1.msra.mxu0 0.0
        %447 = vmatprep.subr.mxu0 0.0
        %448 = vmatpush1.msra.mxu0 0.0
        %449 = vmatprep.subr.mxu0 0.0
        %450 = vmatpush1.msra.mxu0 0.0
        %451 = vmatprep.subr.mxu0 0.0
        %452 = vmatpush1.msra.mxu0 0.0
        %453 = vmatprep.subr.mxu0 0.0
        %454 = vmatpush1.msra.mxu0 0.0
        %455 = vmatprep.subr.mxu0 0.0
        %456 = vmatpush1.msra.mxu0 0.0
        %457 = vmatprep.subr.mxu0 0.0
        %458 = vmatpush1.msra.mxu0 0.0
        %459 = vmatprep.subr.mxu0 0.0
        %460 = vmatpush1.msra.mxu0 0.0
        %461 = vmatprep.subr.mxu0 0.0
        %462 = vmatpush1.msra.mxu0 0.0
        %463 = vmatprep.subr.mxu0 0.0
        %464 = vmatpush1.msra.mxu0 %v271
        %465 = vmatprep.subr.mxu0 0.0
        %466 = vmatpush1.msra.mxu0 %v270
        %467 = vmatprep.subr.mxu0 0.0
        %468 = vmatpush2.msra.mxu0 0.0
        %469 = vmatprep.subr.mxu0 0.0
        %470 = vmatpush2.msra.mxu0 0.0
        %471 = vmatprep.subr.mxu0 0.0
        %472 = vmatpush2.msra.mxu0 0.0
        %473 = vmatprep.subr.mxu0 0.0
        %474 = vmatpush2.msra.mxu0 0.0
        %475 = vmatprep.subr.mxu0 0.0
        %476 = vmatpush2.msra.mxu0 0.0
        %477 = vmatprep.subr.mxu0 0.0
        %478 = vmatpush2.msra.mxu0 0.0
        %479 = vmatprep.subr.mxu0 0.0
        %480 = vmatpush2.msra.mxu0 0.0
        %481 = vmatprep.subr.mxu0 0.0
        %482 = vmatpush2.msra.mxu0 0.0
        %483 = vmatprep.subr.mxu0 0.0
        %484 = vmatpush2.msra.mxu0 0.0
        %485 = vmatprep.subr.mxu0 0.0
        %486 = vmatpush2.msra.mxu0 0.0
        %487 = vmatprep.subr.mxu0 0.0
        %488 = vmatpush2.msra.mxu0 0.0
        %489 = vmatprep.subr.mxu0 0.0
        %490 = vmatpush2.msra.mxu0 0.0
        %491 = vmatprep.subr.mxu0 0.0
        %492 = vmatpush2.msra.mxu0 0.0
        %493 = vmatprep.subr.mxu0 0.0
        %494 = vmatpush2.msra.mxu0 0.0
        %495 = vmatprep.subr.mxu0 0.0
        %496 = vmatpush2.msra.mxu0 0.0
        %497 = vmatprep.subr.mxu0 0.0
        %498 = vmatpush2.msra.mxu0 0.0
        %499 = vmatprep.mubr.f32.mxu0 0.0
        %500 = vmatmul.mubr.f32.gmra.mxu0 %v412
        %v501 = vpop.f32.mrf.mxu0
        %v502 = vadd.f32 0.0, %v501
        %v503 = vpop.f32.mrf.mxu0
        %504 = vmatprep.mubr.f32.mxu0 0.0
        %505 = vmatmul.mubr.f32.gmra.mxu0 %v415
        %v506 = vpop.f32.mrf.mxu0
        %v507 = vadd.f32 0.0, %v506
        %v508 = vpop.f32.mrf.mxu0
        %509 = vmatprep.mubr.f32.mxu0 0.0
        %510 = vmatmul.mubr.f32.gmra.mxu0 %v418
        %v511 = vpop.f32.mrf.mxu0
        %v512 = vadd.f32 0.0, %v511
        %v513 = vpop.f32.mrf.mxu0
        %514 = vmatprep.mubr.f32.mxu0 0.0
        %515 = vmatmul.mubr.f32.gmra.mxu0 %v421
        %v516 = vpop.f32.mrf.mxu0
        %v517 = vadd.f32 0.0, %v516
        %v518 = vpop.f32.mrf.mxu0
        %519 = vmatprep.mubr.f32.mxu0 0.0
        %520 = vmatmul.mubr.f32.gmra.mxu0 %v424
        %v521 = vpop.f32.mrf.mxu0
        %v522 = vadd.f32 0.0, %v521
        %v523 = vpop.f32.mrf.mxu0
        %524 = vmatprep.mubr.f32.mxu0 0.0
        %525 = vmatmul.mubr.f32.gmra.mxu0 %v427
        %v526 = vpop.f32.mrf.mxu0
        %v527 = vadd.f32 0.0, %v526
        %v528 = vpop.f32.mrf.mxu0
        %529 = vmatprep.mubr.f32.mxu0 0.0
        %530 = vmatmul.mubr.f32.gmra.mxu0 %v430
        %v531 = vpop.f32.mrf.mxu0
        %v532 = vadd.f32 0.0, %v531
        %v533 = vpop.f32.mrf.mxu0
        %534 = vmatprep.mubr.f32.mxu0 0.0
        %535 = vmatmul.mubr.f32.gmra.mxu0 %v433
        %v536 = vpop.f32.mrf.mxu0
        %v537 = vadd.f32 0.0, %v536
        %v538 = vpop.f32.mrf.mxu0
        %539 = vdwg.mxu0
        %s540 = scalar_lea.vmem [#allocation2], 64
        %541 = vst.msk [vmem:[%s540] sm:$0xff] %vm402, %v502
        %542 = vst.msk [vmem:[%s540 + $0x8] sm:$0xff] %vm402, %v507
        %543 = vst.msk [vmem:[%s540 + $0x10] sm:$0xff] %vm402, %v512
        %544 = vst.msk [vmem:[%s540 + $0x18] sm:$0xff] %vm402, %v517
        %545 = vst.msk [vmem:[%s540 + $0x20] sm:$0xff] %vm402, %v522
        %546 = vst.msk [vmem:[%s540 + $0x28] sm:$0xff] %vm402, %v527
        %547 = vst.msk [vmem:[%s540 + $0x30] sm:$0xff] %vm402, %v532
        %548 = vst.msk [vmem:[%s540 + $0x38] sm:$0xff] %vm402, %v537
        %v549 = vmul.f32 %v254, %v254
        %v550 = vmul.f32 %v255, %v255
        %v551 = vmul.f32 %v256, %v256
        %v552 = vmul.f32 %v257, %v257
        %v553 = vmul.f32 %v258, %v258
        %v554 = vmul.f32 %v259, %v259
        %v555 = vmul.f32 %v260, %v260
        %v556 = vmul.f32 %v261, %v261
        %v558 = vsel %vm272, %v549, 0
        %v561 = vsel %vm272, %v550, 0
        %v564 = vsel %vm272, %v551, 0
        %v567 = vsel %vm272, %v552, 0
        %v570 = vsel %vm272, %v553, 0
        %v573 = vsel %vm272, %v554, 0
        %v576 = vsel %vm272, %v555, 0
        %v579 = vsel %vm272, %v556, 0
        %581 = vmatprep.subr.mxu0 0.0
        %582 = vmatpush1.msra.mxu0 0.0
        %583 = vmatprep.subr.mxu0 0.0
        %584 = vmatpush1.msra.mxu0 0.0
        %585 = vmatprep.subr.mxu0 0.0
        %586 = vmatpush1.msra.mxu0 0.0
        %587 = vmatprep.subr.mxu0 0.0
        %588 = vmatpush1.msra.mxu0 0.0
        %589 = vmatprep.subr.mxu0 0.0
        %590 = vmatpush1.msra.mxu0 0.0
        %591 = vmatprep.subr.mxu0 0.0
        %592 = vmatpush1.msra.mxu0 0.0
        %593 = vmatprep.subr.mxu0 0.0
        %594 = vmatpush1.msra.mxu0 0.0
        %595 = vmatprep.subr.mxu0 0.0
        %596 = vmatpush1.msra.mxu0 0.0
        %597 = vmatprep.subr.mxu0 0.0
        %598 = vmatpush1.msra.mxu0 0.0
        %599 = vmatprep.subr.mxu0 0.0
        %600 = vmatpush1.msra.mxu0 0.0
        %601 = vmatprep.subr.mxu0 0.0
        %602 = vmatpush1.msra.mxu0 0.0
        %603 = vmatprep.subr.mxu0 0.0
        %604 = vmatpush1.msra.mxu0 0.0
        %605 = vmatprep.subr.mxu0 0.0
        %606 = vmatpush1.msra.mxu0 0.0
        %607 = vmatprep.subr.mxu0 0.0
        %608 = vmatpush1.msra.mxu0 0.0
        %609 = vmatprep.subr.mxu0 0.0
        %610 = vmatpush1.msra.mxu0 %v271
        %611 = vmatprep.subr.mxu0 0.0
        %612 = vmatpush1.msra.mxu0 %v270
        %613 = vmatprep.subr.mxu0 0.0
        %614 = vmatpush2.msra.mxu0 0.0
        %615 = vmatprep.subr.mxu0 0.0
        %616 = vmatpush2.msra.mxu0 0.0
        %617 = vmatprep.subr.mxu0 0.0
        %618 = vmatpush2.msra.mxu0 0.0
        %619 = vmatprep.subr.mxu0 0.0
        %620 = vmatpush2.msra.mxu0 0.0
        %621 = vmatprep.subr.mxu0 0.0
        %622 = vmatpush2.msra.mxu0 0.0
        %623 = vmatprep.subr.mxu0 0.0
        %624 = vmatpush2.msra.mxu0 0.0
        %625 = vmatprep.subr.mxu0 0.0
        %626 = vmatpush2.msra.mxu0 0.0
        %627 = vmatprep.subr.mxu0 0.0
        %628 = vmatpush2.msra.mxu0 0.0
        %629 = vmatprep.subr.mxu0 0.0
        %630 = vmatpush2.msra.mxu0 0.0
        %631 = vmatprep.subr.mxu0 0.0
        %632 = vmatpush2.msra.mxu0 0.0
        %633 = vmatprep.subr.mxu0 0.0
        %634 = vmatpush2.msra.mxu0 0.0
        %635 = vmatprep.subr.mxu0 0.0
        %636 = vmatpush2.msra.mxu0 0.0
        %637 = vmatprep.subr.mxu0 0.0
        %638 = vmatpush2.msra.mxu0 0.0
        %639 = vmatprep.subr.mxu0 0.0
        %640 = vmatpush2.msra.mxu0 0.0
        %641 = vmatprep.subr.mxu0 0.0
        %642 = vmatpush2.msra.mxu0 0.0
        %643 = vmatprep.subr.mxu0 0.0
        %644 = vmatpush2.msra.mxu0 0.0
        %645 = vmatprep.mubr.f32.mxu0 0.0
        %646 = vmatmul.mubr.f32.gmra.mxu0 %v558
        %v647 = vpop.f32.mrf.mxu0
        %v648 = vadd.f32 0.0, %v647
        %v649 = vpop.f32.mrf.mxu0
        %650 = vmatprep.mubr.f32.mxu0 0.0
        %651 = vmatmul.mubr.f32.gmra.mxu0 %v561
        %v652 = vpop.f32.mrf.mxu0
        %v653 = vadd.f32 0.0, %v652
        %v654 = vpop.f32.mrf.mxu0
        %655 = vmatprep.mubr.f32.mxu0 0.0
        %656 = vmatmul.mubr.f32.gmra.mxu0 %v564
        %v657 = vpop.f32.mrf.mxu0
        %v658 = vadd.f32 0.0, %v657
        %v659 = vpop.f32.mrf.mxu0
        %660 = vmatprep.mubr.f32.mxu0 0.0
        %661 = vmatmul.mubr.f32.gmra.mxu0 %v567
        %v662 = vpop.f32.mrf.mxu0
        %v663 = vadd.f32 0.0, %v662
        %v664 = vpop.f32.mrf.mxu0
        %665 = vmatprep.mubr.f32.mxu0 0.0
        %666 = vmatmul.mubr.f32.gmra.mxu0 %v570
        %v667 = vpop.f32.mrf.mxu0
        %v668 = vadd.f32 0.0, %v667
        %v669 = vpop.f32.mrf.mxu0
        %670 = vmatprep.mubr.f32.mxu0 0.0
        %671 = vmatmul.mubr.f32.gmra.mxu0 %v573
        %v672 = vpop.f32.mrf.mxu0
        %v673 = vadd.f32 0.0, %v672
        %v674 = vpop.f32.mrf.mxu0
        %675 = vmatprep.mubr.f32.mxu0 0.0
        %676 = vmatmul.mubr.f32.gmra.mxu0 %v576
        %v677 = vpop.f32.mrf.mxu0
        %v678 = vadd.f32 0.0, %v677
        %v679 = vpop.f32.mrf.mxu0
        %680 = vmatprep.mubr.f32.mxu0 0.0
        %681 = vmatmul.mubr.f32.gmra.mxu0 %v579
        %v682 = vpop.f32.mrf.mxu0
        %v683 = vadd.f32 0.0, %v682
        %v684 = vpop.f32.mrf.mxu0
        %685 = vdwg.mxu0
        %s686 = scalar_lea.vmem [#allocation2], 128
        %687 = vst.msk [vmem:[%s686] sm:$0xff] %vm402, %v648
        %688 = vst.msk [vmem:[%s686 + $0x8] sm:$0xff] %vm402, %v653
        %689 = vst.msk [vmem:[%s686 + $0x10] sm:$0xff] %vm402, %v658
        %690 = vst.msk [vmem:[%s686 + $0x18] sm:$0xff] %vm402, %v663
        %691 = vst.msk [vmem:[%s686 + $0x20] sm:$0xff] %vm402, %v668
        %692 = vst.msk [vmem:[%s686 + $0x28] sm:$0xff] %vm402, %v673
        %693 = vst.msk [vmem:[%s686 + $0x30] sm:$0xff] %vm402, %v678
        %694 = vst.msk [vmem:[%s686 + $0x38] sm:$0xff] %vm402, %v683
        %v695 = vmul.f32 %v262, %v262
        %v696 = vmul.f32 %v263, %v263
        %v697 = vmul.f32 %v264, %v264
        %v698 = vmul.f32 %v265, %v265
        %v699 = vmul.f32 %v266, %v266
        %v700 = vmul.f32 %v267, %v267
        %v701 = vmul.f32 %v268, %v268
        %v702 = vmul.f32 %v269, %v269
        %v704 = vsel %vm272, %v695, 0
        %v707 = vsel %vm272, %v696, 0
        %v710 = vsel %vm272, %v697, 0
        %v713 = vsel %vm272, %v698, 0
        %v716 = vsel %vm272, %v699, 0
        %v719 = vsel %vm272, %v700, 0
        %v722 = vsel %vm272, %v701, 0
        %v725 = vsel %vm272, %v702, 0
        %727 = vmatprep.subr.mxu0 0.0
        %728 = vmatpush1.msra.mxu0 0.0
        %729 = vmatprep.subr.mxu0 0.0
        %730 = vmatpush1.msra.mxu0 0.0
        %731 = vmatprep.subr.mxu0 0.0
        %732 = vmatpush1.msra.mxu0 0.0
        %733 = vmatprep.subr.mxu0 0.0
        %734 = vmatpush1.msra.mxu0 0.0
        %735 = vmatprep.subr.mxu0 0.0
        %736 = vmatpush1.msra.mxu0 0.0
        %737 = vmatprep.subr.mxu0 0.0
        %738 = vmatpush1.msra.mxu0 0.0
        %739 = vmatprep.subr.mxu0 0.0
        %740 = vmatpush1.msra.mxu0 0.0
        %741 = vmatprep.subr.mxu0 0.0
        %742 = vmatpush1.msra.mxu0 0.0
        %743 = vmatprep.subr.mxu0 0.0
        %744 = vmatpush1.msra.mxu0 0.0
        %745 = vmatprep.subr.mxu0 0.0
        %746 = vmatpush1.msra.mxu0 0.0
        %747 = vmatprep.subr.mxu0 0.0
        %748 = vmatpush1.msra.mxu0 0.0
        %749 = vmatprep.subr.mxu0 0.0
        %750 = vmatpush1.msra.mxu0 0.0
        %751 = vmatprep.subr.mxu0 0.0
        %752 = vmatpush1.msra.mxu0 0.0
        %753 = vmatprep.subr.mxu0 0.0
        %754 = vmatpush1.msra.mxu0 0.0
        %755 = vmatprep.subr.mxu0 0.0
        %756 = vmatpush1.msra.mxu0 %v271
        %757 = vmatprep.subr.mxu0 0.0
        %758 = vmatpush1.msra.mxu0 %v270
        %759 = vmatprep.subr.mxu0 0.0
        %760 = vmatpush2.msra.mxu0 0.0
        %761 = vmatprep.subr.mxu0 0.0
        %762 = vmatpush2.msra.mxu0 0.0
        %763 = vmatprep.subr.mxu0 0.0
        %764 = vmatpush2.msra.mxu0 0.0
        %765 = vmatprep.subr.mxu0 0.0
        %766 = vmatpush2.msra.mxu0 0.0
        %767 = vmatprep.subr.mxu0 0.0
        %768 = vmatpush2.msra.mxu0 0.0
        %769 = vmatprep.subr.mxu0 0.0
        %770 = vmatpush2.msra.mxu0 0.0
        %771 = vmatprep.subr.mxu0 0.0
        %772 = vmatpush2.msra.mxu0 0.0
        %773 = vmatprep.subr.mxu0 0.0
        %774 = vmatpush2.msra.mxu0 0.0
        %775 = vmatprep.subr.mxu0 0.0
        %776 = vmatpush2.msra.mxu0 0.0
        %777 = vmatprep.subr.mxu0 0.0
        %778 = vmatpush2.msra.mxu0 0.0
        %779 = vmatprep.subr.mxu0 0.0
        %780 = vmatpush2.msra.mxu0 0.0
        %781 = vmatprep.subr.mxu0 0.0
        %782 = vmatpush2.msra.mxu0 0.0
        %783 = vmatprep.subr.mxu0 0.0
        %784 = vmatpush2.msra.mxu0 0.0
        %785 = vmatprep.subr.mxu0 0.0
        %786 = vmatpush2.msra.mxu0 0.0
        %787 = vmatprep.subr.mxu0 0.0
        %788 = vmatpush2.msra.mxu0 0.0
        %789 = vmatprep.subr.mxu0 0.0
        %790 = vmatpush2.msra.mxu0 0.0
        %791 = vmatprep.mubr.f32.mxu0 0.0
        %792 = vmatmul.mubr.f32.gmra.mxu0 %v704
        %v793 = vpop.f32.mrf.mxu0
        %v794 = vadd.f32 0.0, %v793
        %v795 = vpop.f32.mrf.mxu0
        %796 = vmatprep.mubr.f32.mxu0 0.0
        %797 = vmatmul.mubr.f32.gmra.mxu0 %v707
        %v798 = vpop.f32.mrf.mxu0
        %v799 = vadd.f32 0.0, %v798
        %v800 = vpop.f32.mrf.mxu0
        %801 = vmatprep.mubr.f32.mxu0 0.0
        %802 = vmatmul.mubr.f32.gmra.mxu0 %v710
        %v803 = vpop.f32.mrf.mxu0
        %v804 = vadd.f32 0.0, %v803
        %v805 = vpop.f32.mrf.mxu0
        %806 = vmatprep.mubr.f32.mxu0 0.0
        %807 = vmatmul.mubr.f32.gmra.mxu0 %v713
        %v808 = vpop.f32.mrf.mxu0
        %v809 = vadd.f32 0.0, %v808
        %v810 = vpop.f32.mrf.mxu0
        %811 = vmatprep.mubr.f32.mxu0 0.0
        %812 = vmatmul.mubr.f32.gmra.mxu0 %v716
        %v813 = vpop.f32.mrf.mxu0
        %v814 = vadd.f32 0.0, %v813
        %v815 = vpop.f32.mrf.mxu0
        %816 = vmatprep.mubr.f32.mxu0 0.0
        %817 = vmatmul.mubr.f32.gmra.mxu0 %v719
        %v818 = vpop.f32.mrf.mxu0
        %v819 = vadd.f32 0.0, %v818
        %v820 = vpop.f32.mrf.mxu0
        %821 = vmatprep.mubr.f32.mxu0 0.0
        %822 = vmatmul.mubr.f32.gmra.mxu0 %v722
        %v823 = vpop.f32.mrf.mxu0
        %v824 = vadd.f32 0.0, %v823
        %v825 = vpop.f32.mrf.mxu0
        %826 = vmatprep.mubr.f32.mxu0 0.0
        %827 = vmatmul.mubr.f32.gmra.mxu0 %v725
        %v828 = vpop.f32.mrf.mxu0
        %v829 = vadd.f32 0.0, %v828
        %v830 = vpop.f32.mrf.mxu0
        %831 = vdwg.mxu0
        %s832 = scalar_lea.vmem [#allocation2], 192
        %833 = vst.msk [vmem:[%s832] sm:$0xff] %vm402, %v794
        %834 = vst.msk [vmem:[%s832 + $0x8] sm:$0xff] %vm402, %v799
        %835 = vst.msk [vmem:[%s832 + $0x10] sm:$0xff] %vm402, %v804
        %836 = vst.msk [vmem:[%s832 + $0x18] sm:$0xff] %vm402, %v809
        %837 = vst.msk [vmem:[%s832 + $0x20] sm:$0xff] %vm402, %v814
        %838 = vst.msk [vmem:[%s832 + $0x28] sm:$0xff] %vm402, %v819
        %839 = vst.msk [vmem:[%s832 + $0x30] sm:$0xff] %vm402, %v824
        %840 = vst.msk [vmem:[%s832 + $0x38] sm:$0xff] %vm402, %v829
        %v841 = vmul.f32 %v254, %v262
        %v842 = vmul.f32 %v255, %v263
        %v843 = vmul.f32 %v256, %v264
        %v844 = vmul.f32 %v257, %v265
        %v845 = vmul.f32 %v258, %v266
        %v846 = vmul.f32 %v259, %v267
        %v847 = vmul.f32 %v260, %v268
        %v848 = vmul.f32 %v261, %v269
        %v850 = vsel %vm272, %v841, 0
        %v853 = vsel %vm272, %v842, 0
        %v856 = vsel %vm272, %v843, 0
        %v859 = vsel %vm272, %v844, 0
        %v862 = vsel %vm272, %v845, 0
        %v865 = vsel %vm272, %v846, 0
        %v868 = vsel %vm272, %v847, 0
        %v871 = vsel %vm272, %v848, 0
        %873 = vmatprep.subr.mxu0 0.0
        %874 = vmatpush1.msra.mxu0 0.0
        %875 = vmatprep.subr.mxu0 0.0
        %876 = vmatpush1.msra.mxu0 0.0
        %877 = vmatprep.subr.mxu0 0.0
        %878 = vmatpush1.msra.mxu0 0.0
        %879 = vmatprep.subr.mxu0 0.0
        %880 = vmatpush1.msra.mxu0 0.0
        %881 = vmatprep.subr.mxu0 0.0
        %882 = vmatpush1.msra.mxu0 0.0
        %883 = vmatprep.subr.mxu0 0.0
        %884 = vmatpush1.msra.mxu0 0.0
        %885 = vmatprep.subr.mxu0 0.0
        %886 = vmatpush1.msra.mxu0 0.0
        %887 = vmatprep.subr.mxu0 0.0
        %888 = vmatpush1.msra.mxu0 0.0
        %889 = vmatprep.subr.mxu0 0.0
        %890 = vmatpush1.msra.mxu0 0.0
        %891 = vmatprep.subr.mxu0 0.0
        %892 = vmatpush1.msra.mxu0 0.0
        %893 = vmatprep.subr.mxu0 0.0
        %894 = vmatpush1.msra.mxu0 0.0
        %895 = vmatprep.subr.mxu0 0.0
        %896 = vmatpush1.msra.mxu0 0.0
        %897 = vmatprep.subr.mxu0 0.0
        %898 = vmatpush1.msra.mxu0 0.0
        %899 = vmatprep.subr.mxu0 0.0
        %900 = vmatpush1.msra.mxu0 0.0
        %901 = vmatprep.subr.mxu0 0.0
        %902 = vmatpush1.msra.mxu0 %v271
        %903 = vmatprep.subr.mxu0 0.0
        %904 = vmatpush1.msra.mxu0 %v270
        %905 = vmatprep.subr.mxu0 0.0
        %906 = vmatpush2.msra.mxu0 0.0
        %907 = vmatprep.subr.mxu0 0.0
        %908 = vmatpush2.msra.mxu0 0.0
        %909 = vmatprep.subr.mxu0 0.0
        %910 = vmatpush2.msra.mxu0 0.0
        %911 = vmatprep.subr.mxu0 0.0
        %912 = vmatpush2.msra.mxu0 0.0
        %913 = vmatprep.subr.mxu0 0.0
        %914 = vmatpush2.msra.mxu0 0.0
        %915 = vmatprep.subr.mxu0 0.0
        %916 = vmatpush2.msra.mxu0 0.0
        %917 = vmatprep.subr.mxu0 0.0
        %918 = vmatpush2.msra.mxu0 0.0
        %919 = vmatprep.subr.mxu0 0.0
        %920 = vmatpush2.msra.mxu0 0.0
        %921 = vmatprep.subr.mxu0 0.0
        %922 = vmatpush2.msra.mxu0 0.0
        %923 = vmatprep.subr.mxu0 0.0
        %924 = vmatpush2.msra.mxu0 0.0
        %925 = vmatprep.subr.mxu0 0.0
        %926 = vmatpush2.msra.mxu0 0.0
        %927 = vmatprep.subr.mxu0 0.0
        %928 = vmatpush2.msra.mxu0 0.0
        %929 = vmatprep.subr.mxu0 0.0
        %930 = vmatpush2.msra.mxu0 0.0
        %931 = vmatprep.subr.mxu0 0.0
        %932 = vmatpush2.msra.mxu0 0.0
        %933 = vmatprep.subr.mxu0 0.0
        %934 = vmatpush2.msra.mxu0 0.0
        %935 = vmatprep.subr.mxu0 0.0
        %936 = vmatpush2.msra.mxu0 0.0
        %937 = vmatprep.mubr.f32.mxu0 0.0
        %938 = vmatmul.mubr.f32.gmra.mxu0 %v850
        %v939 = vpop.f32.mrf.mxu0
        %v940 = vadd.f32 0.0, %v939
        %v941 = vpop.f32.mrf.mxu0
        %942 = vmatprep.mubr.f32.mxu0 0.0
        %943 = vmatmul.mubr.f32.gmra.mxu0 %v853
        %v944 = vpop.f32.mrf.mxu0
        %v945 = vadd.f32 0.0, %v944
        %v946 = vpop.f32.mrf.mxu0
        %947 = vmatprep.mubr.f32.mxu0 0.0
        %948 = vmatmul.mubr.f32.gmra.mxu0 %v856
        %v949 = vpop.f32.mrf.mxu0
        %v950 = vadd.f32 0.0, %v949
        %v951 = vpop.f32.mrf.mxu0
        %952 = vmatprep.mubr.f32.mxu0 0.0
        %953 = vmatmul.mubr.f32.gmra.mxu0 %v859
        %v954 = vpop.f32.mrf.mxu0
        %v955 = vadd.f32 0.0, %v954
        %v956 = vpop.f32.mrf.mxu0
        %957 = vmatprep.mubr.f32.mxu0 0.0
        %958 = vmatmul.mubr.f32.gmra.mxu0 %v862
        %v959 = vpop.f32.mrf.mxu0
        %v960 = vadd.f32 0.0, %v959
        %v961 = vpop.f32.mrf.mxu0
        %962 = vmatprep.mubr.f32.mxu0 0.0
        %963 = vmatmul.mubr.f32.gmra.mxu0 %v865
        %v964 = vpop.f32.mrf.mxu0
        %v965 = vadd.f32 0.0, %v964
        %v966 = vpop.f32.mrf.mxu0
        %967 = vmatprep.mubr.f32.mxu0 0.0
        %968 = vmatmul.mubr.f32.gmra.mxu0 %v868
        %v969 = vpop.f32.mrf.mxu0
        %v970 = vadd.f32 0.0, %v969
        %v971 = vpop.f32.mrf.mxu0
        %972 = vmatprep.mubr.f32.mxu0 0.0
        %973 = vmatmul.mubr.f32.gmra.mxu0 %v871
        %v974 = vpop.f32.mrf.mxu0
        %v975 = vadd.f32 0.0, %v974
        %v976 = vpop.f32.mrf.mxu0
        %977 = vdwg.mxu0
        %s978 = scalar_lea.vmem [#allocation2], 256
        %979 = vst.msk [vmem:[%s978] sm:$0xff] %vm402, %v940
        %980 = vst.msk [vmem:[%s978 + $0x8] sm:$0xff] %vm402, %v945
        %981 = vst.msk [vmem:[%s978 + $0x10] sm:$0xff] %vm402, %v950
        %982 = vst.msk [vmem:[%s978 + $0x18] sm:$0xff] %vm402, %v955
        %983 = vst.msk [vmem:[%s978 + $0x20] sm:$0xff] %vm402, %v960
        %984 = vst.msk [vmem:[%s978 + $0x28] sm:$0xff] %vm402, %v965
        %985 = vst.msk [vmem:[%s978 + $0x30] sm:$0xff] %vm402, %v970
        %986 = vst.msk [vmem:[%s978 + $0x38] sm:$0xff] %vm402, %v975
        %v987 = vld [vmem:[#allocation2 + $0x5] sm:$0x3f]
        %v988 = vld [vmem:[#allocation2 + $0x15] sm:$0x3f]
        %v989 = vld [vmem:[#allocation2 + $0x25] sm:$0x3f]
        %v990 = vld [vmem:[#allocation2 + $0x35] sm:$0x3f]
        %v991 = vld [vmem:[#allocation2 + $0x45] sm:$0x3f]
        %v992 = vld [vmem:[#allocation2 + $0x55] sm:$0x3f]
        %v993 = vld [vmem:[#allocation2 + $0x65] sm:$0x3f]
        %v994 = vld [vmem:[#allocation2 + $0x75] sm:$0x3f]
        %v995 = vld [vmem:[#allocation2 + $0x85] sm:$0x3f]
        %v996 = vld [vmem:[#allocation2 + $0x95] sm:$0x3f]
        %v997 = vld [vmem:[#allocation2 + $0xa5] sm:$0x3f]
        %v998 = vld [vmem:[#allocation2 + $0xb5] sm:$0x3f]
        %v999 = vld [vmem:[#allocation2 + $0xc5] sm:$0x3f]
        %v1000 = vld [vmem:[#allocation2 + $0xd5] sm:$0x3f]
        %v1001 = vld [vmem:[#allocation2 + $0xe5] sm:$0x3f]
        %v1002 = vld [vmem:[#allocation2 + $0xf5] sm:$0x3f]
        %v1003 = vld [vmem:[#allocation2 + $0x105] sm:$0x3f]
        %v1004 = vld [vmem:[#allocation2 + $0x115] sm:$0x3f]
        %v1005 = vld [vmem:[#allocation2 + $0x125] sm:$0x3f]
        %v1006 = vld [vmem:[#allocation2 + $0x135] sm:$0x3f]
        %v1007 = vmul.f32 %v987, 0.26601174
        %v1008 = vmul.f32 %v988, 0.26601174
        %v1009 = vmul.f32 %v989, 0.26601174
        %v1010 = vmul.f32 %v990, 0.26601174
        %v1011 = vmul.f32 %v991, 0.26601174
        %v1012 = vmul.f32 %v992, 0.26601174
        %v1013 = vmul.f32 %v993, 0.26601174
        %v1014 = vmul.f32 %v994, 0.26601174
        %v1015 = vmul.f32 %v995, 0.26601174
        %v1016 = vmul.f32 %v996, 0.26601174
        %v1017 = vmul.f32 %v997, 0.26601174
        %v1018 = vmul.f32 %v998, 0.26601174
        %v1019 = vmul.f32 %v999, 0.26601174
        %v1020 = vmul.f32 %v1000, 0.26601174
        %v1021 = vmul.f32 %v1001, 0.26601174
        %v1022 = vmul.f32 %v1002, 0.26601174
        %v1023 = vmul.f32 %v1003, 0.26601174
        %v1024 = vmul.f32 %v1004, 0.26601174
        %v1025 = vmul.f32 %v1005, 0.26601174
        %v1026 = vmul.f32 %v1006, 0.26601174
        %v1027 = vld [vmem:[#allocation2] sm:$0x3f]
        %v1028 = vld [vmem:[#allocation2 + $0x10] sm:$0x3f]
        %v1029 = vld [vmem:[#allocation2 + $0x20] sm:$0x3f]
        %v1030 = vld [vmem:[#allocation2 + $0x30] sm:$0x3f]
        %v1031 = vld [vmem:[#allocation2 + $0x40] sm:$0x3f]
        %v1032 = vld [vmem:[#allocation2 + $0x50] sm:$0x3f]
        %v1033 = vld [vmem:[#allocation2 + $0x60] sm:$0x3f]
        %v1034 = vld [vmem:[#allocation2 + $0x70] sm:$0x3f]
        %v1035 = vld [vmem:[#allocation2 + $0x80] sm:$0x3f]
        %v1036 = vld [vmem:[#allocation2 + $0x90] sm:$0x3f]
        %v1037 = vld [vmem:[#allocation2 + $0xa0] sm:$0x3f]
        %v1038 = vld [vmem:[#allocation2 + $0xb0] sm:$0x3f]
        %v1039 = vld [vmem:[#allocation2 + $0xc0] sm:$0x3f]
        %v1040 = vld [vmem:[#allocation2 + $0xd0] sm:$0x3f]
        %v1041 = vld [vmem:[#allocation2 + $0xe0] sm:$0x3f]
        %v1042 = vld [vmem:[#allocation2 + $0xf0] sm:$0x3f]
        %v1043 = vld [vmem:[#allocation2 + $0x100] sm:$0x3f]
        %v1044 = vld [vmem:[#allocation2 + $0x110] sm:$0x3f]
        %v1045 = vld [vmem:[#allocation2 + $0x120] sm:$0x3f]
        %v1046 = vld [vmem:[#allocation2 + $0x130] sm:$0x3f]
        %v1047 = vld [vmem:[#allocation2 + $0xa] sm:$0x3f]
        %v1048 = vld [vmem:[#allocation2 + $0x1a] sm:$0x3f]
        %v1049 = vld [vmem:[#allocation2 + $0x2a] sm:$0x3f]
        %v1050 = vld [vmem:[#allocation2 + $0x3a] sm:$0x3f]
        %v1051 = vld [vmem:[#allocation2 + $0x4a] sm:$0x3f]
        %v1052 = vld [vmem:[#allocation2 + $0x5a] sm:$0x3f]
        %v1053 = vld [vmem:[#allocation2 + $0x6a] sm:$0x3f]
        %v1054 = vld [vmem:[#allocation2 + $0x7a] sm:$0x3f]
        %v1055 = vld [vmem:[#allocation2 + $0x8a] sm:$0x3f]
        %v1056 = vld [vmem:[#allocation2 + $0x9a] sm:$0x3f]
        %v1057 = vld [vmem:[#allocation2 + $0xaa] sm:$0x3f]
        %v1058 = vld [vmem:[#allocation2 + $0xba] sm:$0x3f]
        %v1059 = vld [vmem:[#allocation2 + $0xca] sm:$0x3f]
        %v1060 = vld [vmem:[#allocation2 + $0xda] sm:$0x3f]
        %v1061 = vld [vmem:[#allocation2 + $0xea] sm:$0x3f]
        %v1062 = vld [vmem:[#allocation2 + $0xfa] sm:$0x3f]
        %v1063 = vld [vmem:[#allocation2 + $0x10a] sm:$0x3f]
        %v1064 = vld [vmem:[#allocation2 + $0x11a] sm:$0x3f]
        %v1065 = vld [vmem:[#allocation2 + $0x12a] sm:$0x3f]
        %v1066 = vld [vmem:[#allocation2 + $0x13a] sm:$0x3f]
        %v1067 = vadd.f32 %v1027, %v1047
        %v1068 = vadd.f32 %v1028, %v1048
        %v1069 = vadd.f32 %v1029, %v1049
        %v1070 = vadd.f32 %v1030, %v1050
        %v1071 = vadd.f32 %v1031, %v1051
        %v1072 = vadd.f32 %v1032, %v1052
        %v1073 = vadd.f32 %v1033, %v1053
        %v1074 = vadd.f32 %v1034, %v1054
        %v1075 = vadd.f32 %v1035, %v1055
        %v1076 = vadd.f32 %v1036, %v1056
        %v1077 = vadd.f32 %v1037, %v1057
        %v1078 = vadd.f32 %v1038, %v1058
        %v1079 = vadd.f32 %v1039, %v1059
        %v1080 = vadd.f32 %v1040, %v1060
        %v1081 = vadd.f32 %v1041, %v1061
        %v1082 = vadd.f32 %v1042, %v1062
        %v1083 = vadd.f32 %v1043, %v1063
        %v1084 = vadd.f32 %v1044, %v1064
        %v1085 = vadd.f32 %v1045, %v1065
        %v1086 = vadd.f32 %v1046, %v1066
        %v1087 = vmul.f32 %v1067, 0.0010283804
        %v1088 = vmul.f32 %v1068, 0.0010283804
        %v1089 = vmul.f32 %v1069, 0.0010283804
        %v1090 = vmul.f32 %v1070, 0.0010283804
        %v1091 = vmul.f32 %v1071, 0.0010283804
        %v1092 = vmul.f32 %v1072, 0.0010283804
        %v1093 = vmul.f32 %v1073, 0.0010283804
        %v1094 = vmul.f32 %v1074, 0.0010283804
        %v1095 = vmul.f32 %v1075, 0.0010283804
        %v1096 = vmul.f32 %v1076, 0.0010283804
        %v1097 = vmul.f32 %v1077, 0.0010283804
        %v1098 = vmul.f32 %v1078, 0.0010283804
        %v1099 = vmul.f32 %v1079, 0.0010283804
        %v1100 = vmul.f32 %v1080, 0.0010283804
        %v1101 = vmul.f32 %v1081, 0.0010283804
        %v1102 = vmul.f32 %v1082, 0.0010283804
        %v1103 = vmul.f32 %v1083, 0.0010283804
        %v1104 = vmul.f32 %v1084, 0.0010283804
        %v1105 = vmul.f32 %v1085, 0.0010283804
        %v1106 = vmul.f32 %v1086, 0.0010283804
        %v1107 = vld [vmem:[#allocation2 + $0x1] sm:$0x3f]
        %v1108 = vld [vmem:[#allocation2 + $0x11] sm:$0x3f]
        %v1109 = vld [vmem:[#allocation2 + $0x21] sm:$0x3f]
        %v1110 = vld [vmem:[#allocation2 + $0x31] sm:$0x3f]
        %v1111 = vld [vmem:[#allocation2 + $0x41] sm:$0x3f]
        %v1112 = vld [vmem:[#allocation2 + $0x51] sm:$0x3f]
        %v1113 = vld [vmem:[#allocation2 + $0x61] sm:$0x3f]
        %v1114 = vld [vmem:[#allocation2 + $0x71] sm:$0x3f]
        %v1115 = vld [vmem:[#allocation2 + $0x81] sm:$0x3f]
        %v1116 = vld [vmem:[#allocation2 + $0x91] sm:$0x3f]
        %v1117 = vld [vmem:[#allocation2 + $0xa1] sm:$0x3f]
        %v1118 = vld [vmem:[#allocation2 + $0xb1] sm:$0x3f]
        %v1119 = vld [vmem:[#allocation2 + $0xc1] sm:$0x3f]
        %v1120 = vld [vmem:[#allocation2 + $0xd1] sm:$0x3f]
        %v1121 = vld [vmem:[#allocation2 + $0xe1] sm:$0x3f]
        %v1122 = vld [vmem:[#allocation2 + $0xf1] sm:$0x3f]
        %v1123 = vld [vmem:[#allocation2 + $0x101] sm:$0x3f]
        %v1124 = vld [vmem:[#allocation2 + $0x111] sm:$0x3f]
        %v1125 = vld [vmem:[#allocation2 + $0x121] sm:$0x3f]
        %v1126 = vld [vmem:[#allocation2 + $0x131] sm:$0x3f]
        %v1127 = vld [vmem:[#allocation2 + $0x9] sm:$0x3f]
        %v1128 = vld [vmem:[#allocation2 + $0x19] sm:$0x3f]
        %v1129 = vld [vmem:[#allocation2 + $0x29] sm:$0x3f]
        %v1130 = vld [vmem:[#allocation2 + $0x39] sm:$0x3f]
        %v1131 = vld [vmem:[#allocation2 + $0x49] sm:$0x3f]
        %v1132 = vld [vmem:[#allocation2 + $0x59] sm:$0x3f]
        %v1133 = vld [vmem:[#allocation2 + $0x69] sm:$0x3f]
        %v1134 = vld [vmem:[#allocation2 + $0x79] sm:$0x3f]
        %v1135 = vld [vmem:[#allocation2 + $0x89] sm:$0x3f]
        %v1136 = vld [vmem:[#allocation2 + $0x99] sm:$0x3f]
        %v1137 = vld [vmem:[#allocation2 + $0xa9] sm:$0x3f]
        %v1138 = vld [vmem:[#allocation2 + $0xb9] sm:$0x3f]
        %v1139 = vld [vmem:[#allocation2 + $0xc9] sm:$0x3f]
        %v1140 = vld [vmem:[#allocation2 + $0xd9] sm:$0x3f]
        %v1141 = vld [vmem:[#allocation2 + $0xe9] sm:$0x3f]
        %v1142 = vld [vmem:[#allocation2 + $0xf9] sm:$0x3f]
        %v1143 = vld [vmem:[#allocation2 + $0x109] sm:$0x3f]
        %v1144 = vld [vmem:[#allocation2 + $0x119] sm:$0x3f]
        %v1145 = vld [vmem:[#allocation2 + $0x129] sm:$0x3f]
        %v1146 = vld [vmem:[#allocation2 + $0x139] sm:$0x3f]
        %v1147 = vadd.f32 %v1107, %v1127
        %v1148 = vadd.f32 %v1108, %v1128
        %v1149 = vadd.f32 %v1109, %v1129
        %v1150 = vadd.f32 %v1110, %v1130
        %v1151 = vadd.f32 %v1111, %v1131
        %v1152 = vadd.f32 %v1112, %v1132
        %v1153 = vadd.f32 %v1113, %v1133
        %v1154 = vadd.f32 %v1114, %v1134
        %v1155 = vadd.f32 %v1115, %v1135
        %v1156 = vadd.f32 %v1116, %v1136
        %v1157 = vadd.f32 %v1117, %v1137
        %v1158 = vadd.f32 %v1118, %v1138
        %v1159 = vadd.f32 %v1119, %v1139
        %v1160 = vadd.f32 %v1120, %v1140
        %v1161 = vadd.f32 %v1121, %v1141
        %v1162 = vadd.f32 %v1122, %v1142
        %v1163 = vadd.f32 %v1123, %v1143
        %v1164 = vadd.f32 %v1124, %v1144
        %v1165 = vadd.f32 %v1125, %v1145
        %v1166 = vadd.f32 %v1126, %v1146
        %v1167 = vmul.f32 %v1147, 0.0075987587
        %v1168 = vmul.f32 %v1148, 0.0075987587
        %v1169 = vmul.f32 %v1149, 0.0075987587
        %v1170 = vmul.f32 %v1150, 0.0075987587
        %v1171 = vmul.f32 %v1151, 0.0075987587
        %v1172 = vmul.f32 %v1152, 0.0075987587
        %v1173 = vmul.f32 %v1153, 0.0075987587
        %v1174 = vmul.f32 %v1154, 0.0075987587
        %v1175 = vmul.f32 %v1155, 0.0075987587
        %v1176 = vmul.f32 %v1156, 0.0075987587
        %v1177 = vmul.f32 %v1157, 0.0075987587
        %v1178 = vmul.f32 %v1158, 0.0075987587
        %v1179 = vmul.f32 %v1159, 0.0075987587
        %v1180 = vmul.f32 %v1160, 0.0075987587
        %v1181 = vmul.f32 %v1161, 0.0075987587
        %v1182 = vmul.f32 %v1162, 0.0075987587
        %v1183 = vmul.f32 %v1163, 0.0075987587
        %v1184 = vmul.f32 %v1164, 0.0075987587
        %v1185 = vmul.f32 %v1165, 0.0075987587
        %v1186 = vmul.f32 %v1166, 0.0075987587
        %v1187 = vadd.f32 %v1087, %v1167
        %v1188 = vadd.f32 %v1088, %v1168
        %v1189 = vadd.f32 %v1089, %v1169
        %v1190 = vadd.f32 %v1090, %v1170
        %v1191 = vadd.f32 %v1091, %v1171
        %v1192 = vadd.f32 %v1092, %v1172
        %v1193 = vadd.f32 %v1093, %v1173
        %v1194 = vadd.f32 %v1094, %v1174
        %v1195 = vadd.f32 %v1095, %v1175
        %v1196 = vadd.f32 %v1096, %v1176
        %v1197 = vadd.f32 %v1097, %v1177
        %v1198 = vadd.f32 %v1098, %v1178
        %v1199 = vadd.f32 %v1099, %v1179
        %v1200 = vadd.f32 %v1100, %v1180
        %v1201 = vadd.f32 %v1101, %v1181
        %v1202 = vadd.f32 %v1102, %v1182
        %v1203 = vadd.f32 %v1103, %v1183
        %v1204 = vadd.f32 %v1104, %v1184
        %v1205 = vadd.f32 %v1105, %v1185
        %v1206 = vadd.f32 %v1106, %v1186
        %v1207 = vld [vmem:[#allocation2 + $0x2] sm:$0x3f]
        %v1208 = vld [vmem:[#allocation2 + $0x12] sm:$0x3f]
        %v1209 = vld [vmem:[#allocation2 + $0x22] sm:$0x3f]
        %v1210 = vld [vmem:[#allocation2 + $0x32] sm:$0x3f]
        %v1211 = vld [vmem:[#allocation2 + $0x42] sm:$0x3f]
        %v1212 = vld [vmem:[#allocation2 + $0x52] sm:$0x3f]
        %v1213 = vld [vmem:[#allocation2 + $0x62] sm:$0x3f]
        %v1214 = vld [vmem:[#allocation2 + $0x72] sm:$0x3f]
        %v1215 = vld [vmem:[#allocation2 + $0x82] sm:$0x3f]
        %v1216 = vld [vmem:[#allocation2 + $0x92] sm:$0x3f]
        %v1217 = vld [vmem:[#allocation2 + $0xa2] sm:$0x3f]
        %v1218 = vld [vmem:[#allocation2 + $0xb2] sm:$0x3f]
        %v1219 = vld [vmem:[#allocation2 + $0xc2] sm:$0x3f]
        %v1220 = vld [vmem:[#allocation2 + $0xd2] sm:$0x3f]
        %v1221 = vld [vmem:[#allocation2 + $0xe2] sm:$0x3f]
        %v1222 = vld [vmem:[#allocation2 + $0xf2] sm:$0x3f]
        %v1223 = vld [vmem:[#allocation2 + $0x102] sm:$0x3f]
        %v1224 = vld [vmem:[#allocation2 + $0x112] sm:$0x3f]
        %v1225 = vld [vmem:[#allocation2 + $0x122] sm:$0x3f]
        %v1226 = vld [vmem:[#allocation2 + $0x132] sm:$0x3f]
        %v1227 = vld [vmem:[#allocation2 + $0x8] sm:$0x3f]
        %v1228 = vld [vmem:[#allocation2 + $0x18] sm:$0x3f]
        %v1229 = vld [vmem:[#allocation2 + $0x28] sm:$0x3f]
        %v1230 = vld [vmem:[#allocation2 + $0x38] sm:$0x3f]
        %v1231 = vld [vmem:[#allocation2 + $0x48] sm:$0x3f]
        %v1232 = vld [vmem:[#allocation2 + $0x58] sm:$0x3f]
        %v1233 = vld [vmem:[#allocation2 + $0x68] sm:$0x3f]
        %v1234 = vld [vmem:[#allocation2 + $0x78] sm:$0x3f]
        %v1235 = vld [vmem:[#allocation2 + $0x88] sm:$0x3f]
        %v1236 = vld [vmem:[#allocation2 + $0x98] sm:$0x3f]
        %v1237 = vld [vmem:[#allocation2 + $0xa8] sm:$0x3f]
        %v1238 = vld [vmem:[#allocation2 + $0xb8] sm:$0x3f]
        %v1239 = vld [vmem:[#allocation2 + $0xc8] sm:$0x3f]
        %v1240 = vld [vmem:[#allocation2 + $0xd8] sm:$0x3f]
        %v1241 = vld [vmem:[#allocation2 + $0xe8] sm:$0x3f]
        %v1242 = vld [vmem:[#allocation2 + $0xf8] sm:$0x3f]
        %v1243 = vld [vmem:[#allocation2 + $0x108] sm:$0x3f]
        %v1244 = vld [vmem:[#allocation2 + $0x118] sm:$0x3f]
        %v1245 = vld [vmem:[#allocation2 + $0x128] sm:$0x3f]
        %v1246 = vld [vmem:[#allocation2 + $0x138] sm:$0x3f]
        %v1247 = vadd.f32 %v1207, %v1227
        %v1248 = vadd.f32 %v1208, %v1228
        %v1249 = vadd.f32 %v1209, %v1229
        %v1250 = vadd.f32 %v1210, %v1230
        %v1251 = vadd.f32 %v1211, %v1231
        %v1252 = vadd.f32 %v1212, %v1232
        %v1253 = vadd.f32 %v1213, %v1233
        %v1254 = vadd.f32 %v1214, %v1234
        %v1255 = vadd.f32 %v1215, %v1235
        %v1256 = vadd.f32 %v1216, %v1236
        %v1257 = vadd.f32 %v1217, %v1237
        %v1258 = vadd.f32 %v1218, %v1238
        %v1259 = vadd.f32 %v1219, %v1239
        %v1260 = vadd.f32 %v1220, %v1240
        %v1261 = vadd.f32 %v1221, %v1241
        %v1262 = vadd.f32 %v1222, %v1242
        %v1263 = vadd.f32 %v1223, %v1243
        %v1264 = vadd.f32 %v1224, %v1244
        %v1265 = vadd.f32 %v1225, %v1245
        %v1266 = vadd.f32 %v1226, %v1246
        %v1267 = vmul.f32 %v1247, 0.036000773
        %v1268 = vmul.f32 %v1248, 0.036000773
        %v1269 = vmul.f32 %v1249, 0.036000773
        %v1270 = vmul.f32 %v1250, 0.036000773
        %v1271 = vmul.f32 %v1251, 0.036000773
        %v1272 = vmul.f32 %v1252, 0.036000773
        %v1273 = vmul.f32 %v1253, 0.036000773
        %v1274 = vmul.f32 %v1254, 0.036000773
        %v1275 = vmul.f32 %v1255, 0.036000773
        %v1276 = vmul.f32 %v1256, 0.036000773
        %v1277 = vmul.f32 %v1257, 0.036000773
        %v1278 = vmul.f32 %v1258, 0.036000773
        %v1279 = vmul.f32 %v1259, 0.036000773
        %v1280 = vmul.f32 %v1260, 0.036000773
        %v1281 = vmul.f32 %v1261, 0.036000773
        %v1282 = vmul.f32 %v1262, 0.036000773
        %v1283 = vmul.f32 %v1263, 0.036000773
        %v1284 = vmul.f32 %v1264, 0.036000773
        %v1285 = vmul.f32 %v1265, 0.036000773
        %v1286 = vmul.f32 %v1266, 0.036000773
        %v1287 = vadd.f32 %v1007, %v1267
        %v1288 = vadd.f32 %v1008, %v1268
        %v1289 = vadd.f32 %v1009, %v1269
        %v1290 = vadd.f32 %v1010, %v1270
        %v1291 = vadd.f32 %v1011, %v1271
        %v1292 = vadd.f32 %v1012, %v1272
        %v1293 = vadd.f32 %v1013, %v1273
        %v1294 = vadd.f32 %v1014, %v1274
        %v1295 = vadd.f32 %v1015, %v1275
        %v1296 = vadd.f32 %v1016, %v1276
        %v1297 = vadd.f32 %v1017, %v1277
        %v1298 = vadd.f32 %v1018, %v1278
        %v1299 = vadd.f32 %v1019, %v1279
        %v1300 = vadd.f32 %v1020, %v1280
        %v1301 = vadd.f32 %v1021, %v1281
        %v1302 = vadd.f32 %v1022, %v1282
        %v1303 = vadd.f32 %v1023, %v1283
        %v1304 = vadd.f32 %v1024, %v1284
        %v1305 = vadd.f32 %v1025, %v1285
        %v1306 = vadd.f32 %v1026, %v1286
        %v1307 = vld [vmem:[#allocation2 + $0x3] sm:$0x3f]
        %v1308 = vld [vmem:[#allocation2 + $0x13] sm:$0x3f]
        %v1309 = vld [vmem:[#allocation2 + $0x23] sm:$0x3f]
        %v1310 = vld [vmem:[#allocation2 + $0x33] sm:$0x3f]
        %v1311 = vld [vmem:[#allocation2 + $0x43] sm:$0x3f]
        %v1312 = vld [vmem:[#allocation2 + $0x53] sm:$0x3f]
        %v1313 = vld [vmem:[#allocation2 + $0x63] sm:$0x3f]
        %v1314 = vld [vmem:[#allocation2 + $0x73] sm:$0x3f]
        %v1315 = vld [vmem:[#allocation2 + $0x83] sm:$0x3f]
        %v1316 = vld [vmem:[#allocation2 + $0x93] sm:$0x3f]
        %v1317 = vld [vmem:[#allocation2 + $0xa3] sm:$0x3f]
        %v1318 = vld [vmem:[#allocation2 + $0xb3] sm:$0x3f]
        %v1319 = vld [vmem:[#allocation2 + $0xc3] sm:$0x3f]
        %v1320 = vld [vmem:[#allocation2 + $0xd3] sm:$0x3f]
        %v1321 = vld [vmem:[#allocation2 + $0xe3] sm:$0x3f]
        %v1322 = vld [vmem:[#allocation2 + $0xf3] sm:$0x3f]
        %v1323 = vld [vmem:[#allocation2 + $0x103] sm:$0x3f]
        %v1324 = vld [vmem:[#allocation2 + $0x113] sm:$0x3f]
        %v1325 = vld [vmem:[#allocation2 + $0x123] sm:$0x3f]
        %v1326 = vld [vmem:[#allocation2 + $0x133] sm:$0x3f]
        %v1327 = vld [vmem:[#allocation2 + $0x7] sm:$0x3f]
        %v1328 = vld [vmem:[#allocation2 + $0x17] sm:$0x3f]
        %v1329 = vld [vmem:[#allocation2 + $0x27] sm:$0x3f]
        %v1330 = vld [vmem:[#allocation2 + $0x37] sm:$0x3f]
        %v1331 = vld [vmem:[#allocation2 + $0x47] sm:$0x3f]
        %v1332 = vld [vmem:[#allocation2 + $0x57] sm:$0x3f]
        %v1333 = vld [vmem:[#allocation2 + $0x67] sm:$0x3f]
        %v1334 = vld [vmem:[#allocation2 + $0x77] sm:$0x3f]
        %v1335 = vld [vmem:[#allocation2 + $0x87] sm:$0x3f]
        %v1336 = vld [vmem:[#allocation2 + $0x97] sm:$0x3f]
        %v1337 = vld [vmem:[#allocation2 + $0xa7] sm:$0x3f]
        %v1338 = vld [vmem:[#allocation2 + $0xb7] sm:$0x3f]
        %v1339 = vld [vmem:[#allocation2 + $0xc7] sm:$0x3f]
        %v1340 = vld [vmem:[#allocation2 + $0xd7] sm:$0x3f]
        %v1341 = vld [vmem:[#allocation2 + $0xe7] sm:$0x3f]
        %v1342 = vld [vmem:[#allocation2 + $0xf7] sm:$0x3f]
        %v1343 = vld [vmem:[#allocation2 + $0x107] sm:$0x3f]
        %v1344 = vld [vmem:[#allocation2 + $0x117] sm:$0x3f]
        %v1345 = vld [vmem:[#allocation2 + $0x127] sm:$0x3f]
        %v1346 = vld [vmem:[#allocation2 + $0x137] sm:$0x3f]
        %v1347 = vadd.f32 %v1307, %v1327
        %v1348 = vadd.f32 %v1308, %v1328
        %v1349 = vadd.f32 %v1309, %v1329
        %v1350 = vadd.f32 %v1310, %v1330
        %v1351 = vadd.f32 %v1311, %v1331
        %v1352 = vadd.f32 %v1312, %v1332
        %v1353 = vadd.f32 %v1313, %v1333
        %v1354 = vadd.f32 %v1314, %v1334
        %v1355 = vadd.f32 %v1315, %v1335
        %v1356 = vadd.f32 %v1316, %v1336
        %v1357 = vadd.f32 %v1317, %v1337
        %v1358 = vadd.f32 %v1318, %v1338
        %v1359 = vadd.f32 %v1319, %v1339
        %v1360 = vadd.f32 %v1320, %v1340
        %v1361 = vadd.f32 %v1321, %v1341
        %v1362 = vadd.f32 %v1322, %v1342
        %v1363 = vadd.f32 %v1323, %v1343
        %v1364 = vadd.f32 %v1324, %v1344
        %v1365 = vadd.f32 %v1325, %v1345
        %v1366 = vadd.f32 %v1326, %v1346
        %v1367 = vmul.f32 %v1347, 0.1093607
        %v1368 = vmul.f32 %v1348, 0.1093607
        %v1369 = vmul.f32 %v1349, 0.1093607
        %v1370 = vmul.f32 %v1350, 0.1093607
        %v1371 = vmul.f32 %v1351, 0.1093607
        %v1372 = vmul.f32 %v1352, 0.1093607
        %v1373 = vmul.f32 %v1353, 0.1093607
        %v1374 = vmul.f32 %v1354, 0.1093607
        %v1375 = vmul.f32 %v1355, 0.1093607
        %v1376 = vmul.f32 %v1356, 0.1093607
        %v1377 = vmul.f32 %v1357, 0.1093607
        %v1378 = vmul.f32 %v1358, 0.1093607
        %v1379 = vmul.f32 %v1359, 0.1093607
        %v1380 = vmul.f32 %v1360, 0.1093607
        %v1381 = vmul.f32 %v1361, 0.1093607
        %v1382 = vmul.f32 %v1362, 0.1093607
        %v1383 = vmul.f32 %v1363, 0.1093607
        %v1384 = vmul.f32 %v1364, 0.1093607
        %v1385 = vmul.f32 %v1365, 0.1093607
        %v1386 = vmul.f32 %v1366, 0.1093607
        %v1387 = vadd.f32 %v1187, %v1367
        %v1388 = vadd.f32 %v1188, %v1368
        %v1389 = vadd.f32 %v1189, %v1369
        %v1390 = vadd.f32 %v1190, %v1370
        %v1391 = vadd.f32 %v1191, %v1371
        %v1392 = vadd.f32 %v1192, %v1372
        %v1393 = vadd.f32 %v1193, %v1373
        %v1394 = vadd.f32 %v1194, %v1374
        %v1395 = vadd.f32 %v1195, %v1375
        %v1396 = vadd.f32 %v1196, %v1376
        %v1397 = vadd.f32 %v1197, %v1377
        %v1398 = vadd.f32 %v1198, %v1378
        %v1399 = vadd.f32 %v1199, %v1379
        %v1400 = vadd.f32 %v1200, %v1380
        %v1401 = vadd.f32 %v1201, %v1381
        %v1402 = vadd.f32 %v1202, %v1382
        %v1403 = vadd.f32 %v1203, %v1383
        %v1404 = vadd.f32 %v1204, %v1384
        %v1405 = vadd.f32 %v1205, %v1385
        %v1406 = vadd.f32 %v1206, %v1386
        %v1407 = vld [vmem:[#allocation2 + $0x4] sm:$0x3f]
        %v1408 = vld [vmem:[#allocation2 + $0x14] sm:$0x3f]
        %v1409 = vld [vmem:[#allocation2 + $0x24] sm:$0x3f]
        %v1410 = vld [vmem:[#allocation2 + $0x34] sm:$0x3f]
        %v1411 = vld [vmem:[#allocation2 + $0x44] sm:$0x3f]
        %v1412 = vld [vmem:[#allocation2 + $0x54] sm:$0x3f]
        %v1413 = vld [vmem:[#allocation2 + $0x64] sm:$0x3f]
        %v1414 = vld [vmem:[#allocation2 + $0x74] sm:$0x3f]
        %v1415 = vld [vmem:[#allocation2 + $0x84] sm:$0x3f]
        %v1416 = vld [vmem:[#allocation2 + $0x94] sm:$0x3f]
        %v1417 = vld [vmem:[#allocation2 + $0xa4] sm:$0x3f]
        %v1418 = vld [vmem:[#allocation2 + $0xb4] sm:$0x3f]
        %v1419 = vld [vmem:[#allocation2 + $0xc4] sm:$0x3f]
        %v1420 = vld [vmem:[#allocation2 + $0xd4] sm:$0x3f]
        %v1421 = vld [vmem:[#allocation2 + $0xe4] sm:$0x3f]
        %v1422 = vld [vmem:[#allocation2 + $0xf4] sm:$0x3f]
        %v1423 = vld [vmem:[#allocation2 + $0x104] sm:$0x3f]
        %v1424 = vld [vmem:[#allocation2 + $0x114] sm:$0x3f]
        %v1425 = vld [vmem:[#allocation2 + $0x124] sm:$0x3f]
        %v1426 = vld [vmem:[#allocation2 + $0x134] sm:$0x3f]
        %v1427 = vld [vmem:[#allocation2 + $0x6] sm:$0x3f]
        %v1428 = vld [vmem:[#allocation2 + $0x16] sm:$0x3f]
        %v1429 = vld [vmem:[#allocation2 + $0x26] sm:$0x3f]
        %v1430 = vld [vmem:[#allocation2 + $0x36] sm:$0x3f]
        %v1431 = vld [vmem:[#allocation2 + $0x46] sm:$0x3f]
        %v1432 = vld [vmem:[#allocation2 + $0x56] sm:$0x3f]
        %v1433 = vld [vmem:[#allocation2 + $0x66] sm:$0x3f]
        %v1434 = vld [vmem:[#allocation2 + $0x76] sm:$0x3f]
        %v1435 = vld [vmem:[#allocation2 + $0x86] sm:$0x3f]
        %v1436 = vld [vmem:[#allocation2 + $0x96] sm:$0x3f]
        %v1437 = vld [vmem:[#allocation2 + $0xa6] sm:$0x3f]
        %v1438 = vld [vmem:[#allocation2 + $0xb6] sm:$0x3f]
        %v1439 = vld [vmem:[#allocation2 + $0xc6] sm:$0x3f]
        %v1440 = vld [vmem:[#allocation2 + $0xd6] sm:$0x3f]
        %v1441 = vld [vmem:[#allocation2 + $0xe6] sm:$0x3f]
        %v1442 = vld [vmem:[#allocation2 + $0xf6] sm:$0x3f]
        %v1443 = vld [vmem:[#allocation2 + $0x106] sm:$0x3f]
        %v1444 = vld [vmem:[#allocation2 + $0x116] sm:$0x3f]
        %v1445 = vld [vmem:[#allocation2 + $0x126] sm:$0x3f]
        %v1446 = vld [vmem:[#allocation2 + $0x136] sm:$0x3f]
        %v1447 = vadd.f32 %v1407, %v1427
        %v1448 = vadd.f32 %v1408, %v1428
        %v1449 = vadd.f32 %v1409, %v1429
        %v1450 = vadd.f32 %v1410, %v1430
        %v1451 = vadd.f32 %v1411, %v1431
        %v1452 = vadd.f32 %v1412, %v1432
        %v1453 = vadd.f32 %v1413, %v1433
        %v1454 = vadd.f32 %v1414, %v1434
        %v1455 = vadd.f32 %v1415, %v1435
        %v1456 = vadd.f32 %v1416, %v1436
        %v1457 = vadd.f32 %v1417, %v1437
        %v1458 = vadd.f32 %v1418, %v1438
        %v1459 = vadd.f32 %v1419, %v1439
        %v1460 = vadd.f32 %v1420, %v1440
        %v1461 = vadd.f32 %v1421, %v1441
        %v1462 = vadd.f32 %v1422, %v1442
        %v1463 = vadd.f32 %v1423, %v1443
        %v1464 = vadd.f32 %v1424, %v1444
        %v1465 = vadd.f32 %v1425, %v1445
        %v1466 = vadd.f32 %v1426, %v1446
        %v1467 = vmul.f32 %v1447, 0.21300554
        %v1468 = vmul.f32 %v1448, 0.21300554
        %v1469 = vmul.f32 %v1449, 0.21300554
        %v1470 = vmul.f32 %v1450, 0.21300554
        %v1471 = vmul.f32 %v1451, 0.21300554
        %v1472 = vmul.f32 %v1452, 0.21300554
        %v1473 = vmul.f32 %v1453, 0.21300554
        %v1474 = vmul.f32 %v1454, 0.21300554
        %v1475 = vmul.f32 %v1455, 0.21300554
        %v1476 = vmul.f32 %v1456, 0.21300554
        %v1477 = vmul.f32 %v1457, 0.21300554
        %v1478 = vmul.f32 %v1458, 0.21300554
        %v1479 = vmul.f32 %v1459, 0.21300554
        %v1480 = vmul.f32 %v1460, 0.21300554
        %v1481 = vmul.f32 %v1461, 0.21300554
        %v1482 = vmul.f32 %v1462, 0.21300554
        %v1483 = vmul.f32 %v1463, 0.21300554
        %v1484 = vmul.f32 %v1464, 0.21300554
        %v1485 = vmul.f32 %v1465, 0.21300554
        %v1486 = vmul.f32 %v1466, 0.21300554
        %v1487 = vadd.f32 %v1287, %v1467
        %v1488 = vadd.f32 %v1288, %v1468
        %v1489 = vadd.f32 %v1289, %v1469
        %v1490 = vadd.f32 %v1290, %v1470
        %v1491 = vadd.f32 %v1291, %v1471
        %v1492 = vadd.f32 %v1292, %v1472
        %v1493 = vadd.f32 %v1293, %v1473
        %v1494 = vadd.f32 %v1294, %v1474
        %v1495 = vadd.f32 %v1295, %v1475
        %v1496 = vadd.f32 %v1296, %v1476
        %v1497 = vadd.f32 %v1297, %v1477
        %v1498 = vadd.f32 %v1298, %v1478
        %v1499 = vadd.f32 %v1299, %v1479
        %v1500 = vadd.f32 %v1300, %v1480
        %v1501 = vadd.f32 %v1301, %v1481
        %v1502 = vadd.f32 %v1302, %v1482
        %v1503 = vadd.f32 %v1303, %v1483
        %v1504 = vadd.f32 %v1304, %v1484
        %v1505 = vadd.f32 %v1305, %v1485
        %v1506 = vadd.f32 %v1306, %v1486
        %v1507 = vadd.f32 %v1487, %v1387
        %v1508 = vadd.f32 %v1488, %v1388
        %v1509 = vadd.f32 %v1489, %v1389
        %v1510 = vadd.f32 %v1490, %v1390
        %v1511 = vadd.f32 %v1491, %v1391
        %v1512 = vadd.f32 %v1492, %v1392
        %v1513 = vadd.f32 %v1493, %v1393
        %v1514 = vadd.f32 %v1494, %v1394
        %v1515 = vadd.f32 %v1495, %v1395
        %v1516 = vadd.f32 %v1496, %v1396
        %v1517 = vadd.f32 %v1497, %v1397
        %v1518 = vadd.f32 %v1498, %v1398
        %v1519 = vadd.f32 %v1499, %v1399
        %v1520 = vadd.f32 %v1500, %v1400
        %v1521 = vadd.f32 %v1501, %v1401
        %v1522 = vadd.f32 %v1502, %v1402
        %v1523 = vadd.f32 %v1503, %v1403
        %v1524 = vadd.f32 %v1504, %v1404
        %v1525 = vadd.f32 %v1505, %v1405
        %v1526 = vadd.f32 %v1506, %v1406
        %v1527 = vmul.f32 %v1507, %v1507
        %v1528 = vmul.f32 %v1508, %v1508
        %v1529 = vmul.f32 %v1509, %v1509
        %v1530 = vmul.f32 %v1510, %v1510
        %v1531 = vmul.f32 %v1511, %v1511
        %v1532 = vmul.f32 %v1512, %v1512
        %v1533 = vmul.f32 %v1513, %v1513
        %v1534 = vmul.f32 %v1514, %v1514
        %v1535 = vmul.f32 %v1507, %v1511
        %v1536 = vmul.f32 %v1508, %v1512
        %v1537 = vmul.f32 %v1509, %v1513
        %v1538 = vmul.f32 %v1510, %v1514
        %v1539 = vsub.f32 %v1515, %v1527
        %v1540 = vsub.f32 %v1516, %v1528
        %v1541 = vsub.f32 %v1517, %v1529
        %v1542 = vsub.f32 %v1518, %v1530
        %v1543 = vsub.f32 %v1519, %v1531
        %v1544 = vsub.f32 %v1520, %v1532
        %v1545 = vsub.f32 %v1521, %v1533
        %v1546 = vsub.f32 %v1522, %v1534
        %v1547 = vsub.f32 %v1523, %v1535
        %v1548 = vsub.f32 %v1524, %v1536
        %v1549 = vsub.f32 %v1525, %v1537
        %v1550 = vsub.f32 %v1526, %v1538
        %v1551 = vmul.f32 %v1535, 2.0
        %v1552 = vmul.f32 %v1536, 2.0
        %v1553 = vmul.f32 %v1537, 2.0
        %v1554 = vmul.f32 %v1538, 2.0
        %v1555 = vadd.f32 %v1551, 0.0001
        %v1556 = vadd.f32 %v1552, 0.0001
        %v1557 = vadd.f32 %v1553, 0.0001
        %v1558 = vadd.f32 %v1554, 0.0001
        %v1559 = vmul.f32 %v1547, 2.0
        %v1560 = vmul.f32 %v1548, 2.0
        %v1561 = vmul.f32 %v1549, 2.0
        %v1562 = vmul.f32 %v1550, 2.0
        %v1563 = vadd.f32 %v1559, 0.0009
        %v1564 = vadd.f32 %v1560, 0.0009
        %v1565 = vadd.f32 %v1561, 0.0009
        %v1566 = vadd.f32 %v1562, 0.0009
        %v1567 = vmul.f32 %v1555, %v1563
        %v1568 = vmul.f32 %v1556, %v1564
        %v1569 = vmul.f32 %v1557, %v1565
        %v1570 = vmul.f32 %v1558, %v1566
        %v1571 = vadd.f32 %v1527, %v1531
        %v1572 = vadd.f32 %v1528, %v1532
        %v1573 = vadd.f32 %v1529, %v1533
        %v1574 = vadd.f32 %v1530, %v1534
        %v1575 = vadd.f32 %v1571, 0.0001
        %v1576 = vadd.f32 %v1572, 0.0001
        %v1577 = vadd.f32 %v1573, 0.0001
        %v1578 = vadd.f32 %v1574, 0.0001
        %v1579 = vadd.f32 %v1539, %v1543
        %v1580 = vadd.f32 %v1540, %v1544
        %v1581 = vadd.f32 %v1541, %v1545
        %v1582 = vadd.f32 %v1542, %v1546
        %v1583 = vadd.f32 %v1579, 0.0009
        %v1584 = vadd.f32 %v1580, 0.0009
        %v1585 = vadd.f32 %v1581, 0.0009
        %v1586 = vadd.f32 %v1582, 0.0009
        %v1587 = vmul.f32 %v1575, %v1583
        %v1588 = vmul.f32 %v1576, %v1584
        %v1589 = vmul.f32 %v1577, %v1585
        %v1590 = vmul.f32 %v1578, %v1586
        %v1591 = vrcp.pop %v1587
        %v1592 = vrcp.pop %v1588
        %v1593 = vrcp.pop %v1589
        %v1594 = vrcp.pop %v1590
        %v1595 = vmul.f32 %v1587, %v1591
        %v1596 = vmul.f32 %v1588, %v1592
        %v1597 = vmul.f32 %v1589, %v1593
        %v1598 = vmul.f32 %v1590, %v1594
        %v1599 = vsub.f32 2.0, %v1595
        %v1600 = vsub.f32 2.0, %v1596
        %v1601 = vsub.f32 2.0, %v1597
        %v1602 = vsub.f32 2.0, %v1598
        %v1603 = vmul.f32 %v1591, %v1599
        %v1604 = vmul.f32 %v1592, %v1600
        %v1605 = vmul.f32 %v1593, %v1601
        %v1606 = vmul.f32 %v1594, %v1602
        %v1607 = vmul.f32 %v1567, %v1603
        %v1608 = vmul.f32 %v1568, %v1604
        %v1609 = vmul.f32 %v1569, %v1605
        %v1610 = vmul.f32 %v1570, %v1606
        %vm1611 = vcmask 46080
        %v1612 = vsel %vm1611, %v1607, 0.0
        %v1613 = vrot.slane %v1612, 4
        %v1614 = vadd.f32 %v1612, %v1613
        %v1615 = vrot.slane %v1614, 2
        %v1616 = vadd.f32 %v1614, %v1615
        %v1617 = vrot.slane %v1616, 1
        %v1618 = vadd.f32 %v1616, %v1617
        %v1619 = vsel %vm1611, %v1608, 0.0
        %v1620 = vrot.slane %v1619, 4
        %v1621 = vadd.f32 %v1619, %v1620
        %v1622 = vrot.slane %v1621, 2
        %v1623 = vadd.f32 %v1621, %v1622
        %v1624 = vrot.slane %v1623, 1
        %v1625 = vadd.f32 %v1623, %v1624
        %v1626 = vsel %vm1611, %v1609, 0.0
        %v1627 = vrot.slane %v1626, 4
        %v1628 = vadd.f32 %v1626, %v1627
        %v1629 = vrot.slane %v1628, 2
        %v1630 = vadd.f32 %v1628, %v1629
        %v1631 = vrot.slane %v1630, 1
        %v1632 = vadd.f32 %v1630, %v1631
        %v1633 = vsel %vm1611, %v1610, 0.0
        %v1634 = vrot.slane %v1633, 4
        %v1635 = vadd.f32 %v1633, %v1634
        %v1636 = vrot.slane %v1635, 2
        %v1637 = vadd.f32 %v1635, %v1636
        %v1638 = vrot.slane %v1637, 1
        %v1639 = vadd.f32 %v1637, %v1638
        %vm1644 = vcmask 1041409
        %v1645 = vsel %vm1644, %v1625, %v1618
        %vm1646 = vcmask 1042434
        %v1647 = vsel %vm1646, %v1632, %v1645
        %vm1648 = vcmask 1043459
        %v1649 = vsel %vm1648, %v1639, %v1647
        %vm1651 = vcmask 44032
        %v1652 = vsel %vm1651, %v1649, 0.0
        %1653 = vadd.xlane.f32.xlu0 %v1652
        %v1654 = vpop.xlane.xlu0 %1653
        %v1656 = vlaneseq
        %v1657 = vand.u32 %v1656, 127
        %v1658 = vlaneseq
        %v1659 = vshrl.u32 %v1658, 7
        %v1660 = vsub.s32 %v1657, %v1659
        %v1661 = vrot.slane %v1654, %v1660
        %vm1663 = vcmask 24576
        %1664 = vst.msk [vmem:[%s251] sm:$0x1] %vm1663, %v1661
        %s1665 = sand.u32 %s122, 1
        %s1666 = scalar_lea.sflag [#allocation5], %s1665
        %s1667 = sand.u32 %s122, 1
        %s1668 = scalar_lea.vmem [#allocation8], %s1667
        // Predicated region
        $region41: #{tpu_custom_call.1} parent=31 // pred_check
          %p1669 = pneg %p132
        $region42: #{tpu_custom_call.1} parent=31 // pred_check_branch
          %1671 = sbr.rel (%p1669) target = $region44
        $region43: #{tpu_custom_call.1} parent=31 // pred_region
          %s1673 = ssub.s32 16, 16
          %1674 = vsyncadd %s1666, %s1673
          %s1675 = sadd.s32 %s28, %s27
          %s1676 = smul.addr %s1675, 16
          %s1677 = scalar_lea.hbm %s3, %s1676
          %s1679 = sshll.u32 %s1668, 4
          %s1680 = int_to_ptr.vmem [resolvable:$true] %s1679
          %1682 = dma.vmem_to_hbm [thread:$0]  %s1680, 16, %s1677, %s1666
        $region44: #{tpu_custom_call.1} parent=31 // pred_fallthru
          _
      $region32: #{tpu_custom_call.1} parent=5 // pred_fallthru
        _
      %p1683 = scmp.le.s32.totalorder 2, %s18
      // Predicated region
      $region45: #{tpu_custom_call.1} parent=5 // pred_check
        %p1684 = pneg %p1683
      $region46: #{tpu_custom_call.1} parent=5 // pred_check_branch
        %1686 = sbr.rel (%p1684) target = $region48
      $region47: #{tpu_custom_call.1} parent=5 // pred_region
        %s1687 = ssub.s32 %s18, 2
        // Predicated region
        $region49: #{tpu_custom_call.1} parent=47 // pred_check
          %p1688 = pneg %p138
        $region50: #{tpu_custom_call.1} parent=47 // pred_check_branch
          %1690 = sbr.rel (%p1688) target = $region52
        $region51: #{tpu_custom_call.1} parent=47 // pred_region
          %s1691 = sand.u32 %s123, 1
          %s1692 = scalar_lea.sflag [#allocation5], %s1691
          %s1693 = sand.u32 %s123, 1
          %s1694 = scalar_lea.vmem [#allocation8], %s1693
          %1695 = dma.done %s1692, 16
        $region52: #{tpu_custom_call.1} parent=47 // pred_fallthru
          _
      $region48: #{tpu_custom_call.1} parent=5 // pred_fallthru
        _
    $region6: #{tpu_custom_call.1} parent=1 // loop_footer
      %s22 = sadd.s32 1, %s18
    $region7: #{tpu_custom_call.1} parent=1 // loop_footer_branch
      %17 = sbr.rel target = $region3
    $region8: #{tpu_custom_call.1} parent=1 // loop_exit
      _
    %1696 = vsyncpa [#allocation4], 1
    %s1697 = scalar_lea.sflag [#allocation4], 1
    %1698 = vsyncpa %s1697, 1
    %1699 = vsyncpa [#allocation7], 1
    %s1700 = scalar_lea.sflag [#allocation7], 1
    %1701 = vsyncpa %s1700, 1
    %1702 = vsyncpa [#allocation5], 1
    %s1703 = scalar_lea.sflag [#allocation5], 1
    %1704 = vsyncpa %s1703, 1

</llo_original>
